<compile_context>
chip_gen: v7x
topology: tpu7x:2x2x1
jax: 0.10.0
libtpu: 0.0.40
codegen_flags: <defaults>
</compile_context>

<pallas_src>
import functools
import math

import jax
import jax.numpy as jnp
from jax.experimental import pallas as pl
from jax.experimental.pallas import tpu as pltpu

TEMPERATURE = 0.2
LANE = 128
_VMEM_LIMIT_BYTES = 48 * 1024 * 1024  # headroom on v7x (64 MiB) / above v5e's 16 MiB default


def _l2_normalize(x, eps=1e-12):
    # matches torch.nn.functional.normalize(p=2, dim=1, eps=1e-12)
    norm = jnp.sqrt(jnp.sum(x * x, axis=-1, keepdims=True))
    return x / jnp.maximum(norm, eps)


# ---------------------------------------------------------------------------
# Pass 1: projections. Per batch-row tile: pa, pb (L2-normalized), logit_pos.
# Writes pa (rows), pb pre-transposed (columns) and a lane-dense logit_pos slab.
# ---------------------------------------------------------------------------
def _proj_kernel(a_ref, b_ref,
                 wa1_ref, ba1_ref, wa2_ref, ba2_ref,
                 wb1_ref, bb1_ref, wb2_ref, bb2_ref,
                 pa_ref, pbt_ref, pos_ref):
    # proj_a: Linear -> ReLU -> Linear (bf16 MXU operands, f32 accumulation)
    ha = jnp.dot(a_ref[...], wa1_ref[...], preferred_element_type=jnp.float32) + ba1_ref[...]
    ha = jnp.maximum(ha, 0.0).astype(jnp.bfloat16)
    pa = jnp.dot(ha, wa2_ref[...], preferred_element_type=jnp.float32) + ba2_ref[...]
    pa = _l2_normalize(pa)

    # proj_b: Linear -> ReLU -> Linear
    hb = jnp.dot(b_ref[...], wb1_ref[...], preferred_element_type=jnp.float32) + bb1_ref[...]
    hb = jnp.maximum(hb, 0.0).astype(jnp.bfloat16)
    pb = jnp.dot(hb, wb2_ref[...], preferred_element_type=jnp.float32) + bb2_ref[...]
    pb = _l2_normalize(pb)

    # logit_pos = (pa * pb).sum(-1)  (the reference dots the *normalized* projections)
    pos = jnp.sum(pa * pb, axis=-1, keepdims=True)
    pos_ref[...] = jnp.broadcast_to(pos, pos_ref.shape)      # lane-dense slab store

    pa_ref[...] = pa.astype(jnp.bfloat16)
    # Write pb already transposed (proj, tile) so pass 2 is a plain NN matmul.
    pbt_ref[...] = pb.T.astype(jnp.bfloat16)


# ---------------------------------------------------------------------------
# Pass 2: scores. Per query-row tile: f = pa @ pb^T / T, row-wise logsumexp,
# optional full log-softmax writeback.
# ---------------------------------------------------------------------------
def _score_kernel(pa_ref, pbt_ref, lse_ref, logp_ref=None, *, inv_temp):
    f = jnp.dot(pa_ref[...], pbt_ref[...], preferred_element_type=jnp.float32) * inv_temp
    m = jnp.max(f, axis=-1, keepdims=True)
    lse = m + jnp.log(jnp.sum(jnp.exp(f - m), axis=-1, keepdims=True))
    lse_ref[...] = jnp.broadcast_to(lse, lse_ref.shape)       # lane-dense slab store
    if logp_ref is not None:
        logp_ref[...] = f - lse


def h_cos_critic(a, b, params, *, temperature=TEMPERATURE, return_logp=True,
                 tile=256, interpret=False):
    """H_CosCritic forward compute.

    Returns (out[bs,2], logit_pos[bs], log_p_f_a_b[bs,bs] or None).
    (The original PyTorch forward() discards these and returns None.)
    """
    bs, fea_dim = a.shape
    proj = params[2].shape[1]          # 256

    # bf16 operands for the MXU (accumulation stays f32); biases stay f32.
    a16 = a.astype(jnp.bfloat16)
    b16 = b.astype(jnp.bfloat16)
    wa1, ba1, wa2, ba2, wb1, bb1, wb2, bb2 = params
    kparams = (wa1.astype(jnp.bfloat16), ba1.astype(jnp.float32),
               wa2.astype(jnp.bfloat16), ba2.astype(jnp.float32),
               wb1.astype(jnp.bfloat16), bb1.astype(jnp.float32),
               wb2.astype(jnp.bfloat16), bb2.astype(jnp.float32))

    # Tile of batch rows: <= 256 (v7x VMEM budget); full batch if it is small.
    tb = bs if bs <= tile else tile
    grid = (pl.cdiv(bs, tb),)

    row_map = lambda i: (i, 0)
    col_map = lambda i: (0, i)
    const_map = lambda i: (0, 0)
    w_specs = [pl.BlockSpec(p.shape, const_map) for p in kparams]   # weights stay resident

    cparams = pltpu.CompilerParams(
        dimension_semantics=("parallel",),           # shards the batch grid across TCs on v7x
        vmem_limit_bytes=_VMEM_LIMIT_BYTES)

    pa, pbt, pos_slab = pl.pallas_call(
        _proj_kernel,
        grid=grid,
        in_specs=[pl.BlockSpec((tb, fea_dim), row_map),
                  pl.BlockSpec((tb, fea_dim), row_map)] + w_specs,
        out_specs=(pl.BlockSpec((tb, proj), row_map),
                   pl.BlockSpec((proj, tb), col_map),
                   pl.BlockSpec((tb, LANE), row_map)),
        out_shape=(jax.ShapeDtypeStruct((bs, proj), jnp.bfloat16),
                   jax.ShapeDtypeStruct((proj, bs), jnp.bfloat16),
                   jax.ShapeDtypeStruct((bs, LANE), jnp.float32)),
        compiler_params=cparams,
        interpret=interpret,
    )(a16, b16, *kparams)

    # TODO(synk): for very large bs the full (proj, bs) pbt / (tile, bs) score row no
    # longer fits VMEM; that regime needs a column grid with an online softmax.
    score_kernel = functools.partial(_score_kernel, inv_temp=1.0 / temperature)
    out_specs = [pl.BlockSpec((tb, LANE), row_map)]
    out_shapes = [jax.ShapeDtypeStruct((bs, LANE), jnp.float32)]
    if return_logp:
        out_specs.append(pl.BlockSpec((tb, bs), row_map))
        out_shapes.append(jax.ShapeDtypeStruct((bs, bs), jnp.float32))

    results = pl.pallas_call(
        score_kernel,
        grid=grid,
        in_specs=[pl.BlockSpec((tb, proj), row_map),
                  pl.BlockSpec((proj, bs), const_map)],    # pb^T resident across tiles
        out_specs=tuple(out_specs),
        out_shape=tuple(out_shapes),
        compiler_params=cparams,
        interpret=interpret,
    )(pa, pbt)

    if isinstance(results, (tuple, list)):
        lse_slab = results[0]
        logp = results[1] if return_logp else None
    else:
        lse_slab, logp = results, None

    logit_pos = pos_slab[:, 0]
    lse = lse_slab[:, 0]
    diag = logit_pos / temperature - lse               # diag(log_softmax) algebraically
    out = jnp.stack([diag, jnp.zeros_like(diag)], axis=-1)   # out[:,1] = 0
    return out, logit_pos, logp


def init_params(key, fea_dim, hidden=512, proj=256):
    """PyTorch-style init U(-1/sqrt(fan_in), 1/sqrt(fan_in)).

    Weights stored as (in_features, out_features) (W.T of nn.Linear), biases (1, out).
    """
    def linear(k, fan_in, fan_out):
        kw, kb = jax.random.split(k)
        bound = 1.0 / math.sqrt(fan_in)
        w = jax.random.uniform(kw, (fan_in, fan_out), jnp.float32, -bound, bound)
        bias = jax.random.uniform(kb, (1, fan_out), jnp.float32, -bound, bound)
        return w, bias

    ka1, ka2, kb1, kb2 = jax.random.split(key, 4)
    wa1, ba1 = linear(ka1, fea_dim, hidden)
    wa2, ba2 = linear(ka2, hidden, proj)
    wb1, bb1 = linear(kb1, fea_dim, hidden)
    wb2, bb2 = linear(kb2, hidden, proj)
    return (wa1, ba1, wa2, ba2, wb1, bb1, wb2, bb2)


def _reference(a, b, params, temperature=TEMPERATURE):
    """Matched-precision (bf16 matmul / f32 accumulate) JAX reference."""
    wa1, ba1, wa2, ba2, wb1, bb1, wb2, bb2 = params

    def proj(x, w1, b1, w2, b2):
        h = jnp.dot(x.astype(jnp.bfloat16), w1.astype(jnp.bfloat16),
                    preferred_element_type=jnp.float32) + b1
        h = jnp.maximum(h, 0.0).astype(jnp.bfloat16)
        p = jnp.dot(h, w2.astype(jnp.bfloat16),
                    preferred_element_type=jnp.float32) + b2
        return _l2_normalize(p)

    pa = proj(a, wa1, ba1, wa2, ba2)
    pb = proj(b, wb1, bb1, wb2, bb2)
    logit_pos = jnp.sum(pa * pb, axis=-1)
    f = jnp.dot(pa.astype(jnp.bfloat16), pb.astype(jnp.bfloat16).T,
                preferred_element_type=jnp.float32) / temperature
    logp = jax.nn.log_softmax(f, axis=1)
    out = jnp.stack([jnp.diag(logp), jnp.zeros_like(logit_pos)], axis=-1)
    return out, logit_pos, logp


if __name__ == "__main__":
    key = jax.random.PRNGKey(0)
    k_params, k_a, k_b = jax.random.split(key, 3)

    bs, fea_dim = 8, 32
    params = init_params(k_params, fea_dim)
    a = jax.random.normal(k_a, (bs, fea_dim), jnp.float32)
    b = jax.random.normal(k_b, (bs, fea_dim), jnp.float32)

    out, logit_pos, logp = h_cos_critic(a, b, params, return_logp=True)
    jax.block_until_ready((out, logit_pos, logp))

    # Shape / sanity checks.
    assert out.shape == (bs, 2)
    assert logit_pos.shape == (bs,)
    assert logp.shape == (bs, bs)
    assert bool(jnp.all(jnp.isfinite(logp)))
    assert bool(jnp.all(jnp.isfinite(out)))
    # log-softmax rows exponentiate to ~1.
    assert bool(jnp.allclose(jnp.sum(jnp.exp(logp), axis=1), 1.0, atol=1e-3))
    # out[:,0] equals the diagonal of the log-softmax (up to bf16 rounding of that term).
    assert bool(jnp.allclose(out[:, 0], jnp.diag(logp), atol=5e-2))
    assert bool(jnp.allclose(out[:, 1], 0.0))

    # Matched-precision pure-JAX reference.
    ref_out, ref_pos, ref_logp = _reference(a, b, params)
    assert bool(jnp.allclose(logp, ref_logp, atol=1e-2, rtol=1e-2))
    assert bool(jnp.allclose(logit_pos, ref_pos, atol=1e-2))
    assert bool(jnp.allclose(out[:, 0], ref_out[:, 0], atol=5e-2))

    print("KERNEL_OK")
</pallas_src>

<mosaic_0001>
module attributes {stable_mosaic.version = 11 : i64} {
  func.func @_proj_kernel(%arg0: i32, %arg1: memref<8x32xbf16, #tpu.memory_space<vmem>>, %arg2: memref<8x32xbf16, #tpu.memory_space<vmem>>, %arg3: memref<32x512xbf16, #tpu.memory_space<vmem>>, %arg4: memref<1x512xf32, #tpu.memory_space<vmem>>, %arg5: memref<512x256xbf16, #tpu.memory_space<vmem>>, %arg6: memref<1x256xf32, #tpu.memory_space<vmem>>, %arg7: memref<32x512xbf16, #tpu.memory_space<vmem>>, %arg8: memref<1x512xf32, #tpu.memory_space<vmem>>, %arg9: memref<512x256xbf16, #tpu.memory_space<vmem>>, %arg10: memref<1x256xf32, #tpu.memory_space<vmem>>, %arg11: memref<8x256xbf16, #tpu.memory_space<vmem>>, %arg12: memref<256x8xbf16, #tpu.memory_space<vmem>>, %arg13: memref<8x128xf32, #tpu.memory_space<vmem>>) attributes {dimension_semantics = [#tpu.dimension_semantics<parallel>], iteration_bounds = array<i64: 1>, scalar_prefetch = 0 : i64, scratch_operands = 0 : i64, tpu.core_type = #tpu.core_type<tc>, window_params = [{transform_indices = @transform_0, window_bounds = array<i64: 8, 32>}, {transform_indices = @transform_1, window_bounds = array<i64: 8, 32>}, {pipeline_mode = #tpu.pipeline_mode<synchronous>, transform_indices = @transform_2, window_bounds = array<i64: 32, 512>}, {pipeline_mode = #tpu.pipeline_mode<synchronous>, transform_indices = @transform_3, window_bounds = array<i64: 1, 512>}, {pipeline_mode = #tpu.pipeline_mode<synchronous>, transform_indices = @transform_4, window_bounds = array<i64: 512, 256>}, {pipeline_mode = #tpu.pipeline_mode<synchronous>, transform_indices = @transform_5, window_bounds = array<i64: 1, 256>}, {pipeline_mode = #tpu.pipeline_mode<synchronous>, transform_indices = @transform_6, window_bounds = array<i64: 32, 512>}, {pipeline_mode = #tpu.pipeline_mode<synchronous>, transform_indices = @transform_7, window_bounds = array<i64: 1, 512>}, {pipeline_mode = #tpu.pipeline_mode<synchronous>, transform_indices = @transform_8, window_bounds = array<i64: 512, 256>}, {pipeline_mode = #tpu.pipeline_mode<synchronous>, transform_indices = @transform_9, window_bounds = array<i64: 1, 256>}, {transform_indices = @transform_10, window_bounds = array<i64: 8, 256>}, {transform_indices = @transform_11, window_bounds = array<i64: 256, 8>}, {transform_indices = @transform_12, window_bounds = array<i64: 8, 128>}]} {
    %c0 = arith.constant 0 : index
    %c0_0 = arith.constant 0 : index
    %0 = vector.load %arg1[%c0, %c0_0] : memref<8x32xbf16, #tpu.memory_space<vmem>>, vector<8x32xbf16>
    %c0_1 = arith.constant 0 : index
    %c0_2 = arith.constant 0 : index
    %1 = vector.load %arg3[%c0_1, %c0_2] : memref<32x512xbf16, #tpu.memory_space<vmem>>, vector<32x512xbf16>
    %cst = arith.constant dense<0.000000e+00> : vector<8x512xf32>
    %2 = tpu.matmul %0, %1, %cst {dimension_numbers = #tpu.dot_dimension_numbers<[1], [0], [0], [1], [0, 0, 1, 1], [], []>} : vector<8x32xbf16>, vector<32x512xbf16>, vector<8x512xf32> -> vector<8x512xf32>
    %c0_3 = arith.constant 0 : index
    %c0_4 = arith.constant 0 : index
    %3 = vector.load %arg4[%c0_3, %c0_4] : memref<1x512xf32, #tpu.memory_space<vmem>>, vector<1x512xf32>
    %4 = vector.broadcast %3 : vector<1x512xf32> to vector<8x512xf32>
    %5 = arith.addf %2, %4 : vector<8x512xf32>
    %cst_5 = arith.constant 0.000000e+00 : f32
    %6 = vector.broadcast %cst_5 : f32 to vector<8x512xf32>
    %7 = arith.maximumf %5, %6 : vector<8x512xf32>
    %8 = arith.truncf %7 : vector<8x512xf32> to vector<8x512xbf16>
    %c0_6 = arith.constant 0 : index
    %c0_7 = arith.constant 0 : index
    %9 = vector.load %arg5[%c0_6, %c0_7] : memref<512x256xbf16, #tpu.memory_space<vmem>>, vector<512x256xbf16>
    %cst_8 = arith.constant dense<0.000000e+00> : vector<8x256xf32>
    %10 = tpu.matmul %8, %9, %cst_8 {dimension_numbers = #tpu.dot_dimension_numbers<[1], [0], [0], [1], [0, 0, 1, 1], [], []>} : vector<8x512xbf16>, vector<512x256xbf16>, vector<8x256xf32> -> vector<8x256xf32>
    %c0_9 = arith.constant 0 : index
    %c0_10 = arith.constant 0 : index
    %11 = vector.load %arg6[%c0_9, %c0_10] : memref<1x256xf32, #tpu.memory_space<vmem>>, vector<1x256xf32>
    %12 = vector.broadcast %11 : vector<1x256xf32> to vector<8x256xf32>
    %13 = arith.addf %10, %12 : vector<8x256xf32>
    %14 = arith.mulf %13, %13 : vector<8x256xf32>
    %cst_11 = arith.constant dense<0.000000e+00> : vector<8xf32>
    %15 = vector.multi_reduction <add>, %14, %cst_11 [1] : vector<8x256xf32> to vector<8xf32>
    %16 = vector.shape_cast %15 : vector<8xf32> to vector<8x1xf32>
    %17 = math.sqrt %16 : vector<8x1xf32>
    %cst_12 = arith.constant 9.99999996E-13 : f32
    %18 = vector.broadcast %cst_12 : f32 to vector<8x1xf32>
    %19 = arith.maximumf %17, %18 : vector<8x1xf32>
    %20 = vector.broadcast %19 : vector<8x1xf32> to vector<8x256xf32>
    %21 = arith.divf %13, %20 : vector<8x256xf32>
    %c0_13 = arith.constant 0 : index
    %c0_14 = arith.constant 0 : index
    %22 = vector.load %arg2[%c0_13, %c0_14] : memref<8x32xbf16, #tpu.memory_space<vmem>>, vector<8x32xbf16>
    %c0_15 = arith.constant 0 : index
    %c0_16 = arith.constant 0 : index
    %23 = vector.load %arg7[%c0_15, %c0_16] : memref<32x512xbf16, #tpu.memory_space<vmem>>, vector<32x512xbf16>
    %cst_17 = arith.constant dense<0.000000e+00> : vector<8x512xf32>
    %24 = tpu.matmul %22, %23, %cst_17 {dimension_numbers = #tpu.dot_dimension_numbers<[1], [0], [0], [1], [0, 0, 1, 1], [], []>} : vector<8x32xbf16>, vector<32x512xbf16>, vector<8x512xf32> -> vector<8x512xf32>
    %c0_18 = arith.constant 0 : index
    %c0_19 = arith.constant 0 : index
    %25 = vector.load %arg8[%c0_18, %c0_19] : memref<1x512xf32, #tpu.memory_space<vmem>>, vector<1x512xf32>
    %26 = vector.broadcast %25 : vector<1x512xf32> to vector<8x512xf32>
    %27 = arith.addf %24, %26 : vector<8x512xf32>
    %cst_20 = arith.constant 0.000000e+00 : f32
    %28 = vector.broadcast %cst_20 : f32 to vector<8x512xf32>
    %29 = arith.maximumf %27, %28 : vector<8x512xf32>
    %30 = arith.truncf %29 : vector<8x512xf32> to vector<8x512xbf16>
    %c0_21 = arith.constant 0 : index
    %c0_22 = arith.constant 0 : index
    %31 = vector.load %arg9[%c0_21, %c0_22] : memref<512x256xbf16, #tpu.memory_space<vmem>>, vector<512x256xbf16>
    %cst_23 = arith.constant dense<0.000000e+00> : vector<8x256xf32>
    %32 = tpu.matmul %30, %31, %cst_23 {dimension_numbers = #tpu.dot_dimension_numbers<[1], [0], [0], [1], [0, 0, 1, 1], [], []>} : vector<8x512xbf16>, vector<512x256xbf16>, vector<8x256xf32> -> vector<8x256xf32>
    %c0_24 = arith.constant 0 : index
    %c0_25 = arith.constant 0 : index
    %33 = vector.load %arg10[%c0_24, %c0_25] : memref<1x256xf32, #tpu.memory_space<vmem>>, vector<1x256xf32>
    %34 = vector.broadcast %33 : vector<1x256xf32> to vector<8x256xf32>
    %35 = arith.addf %32, %34 : vector<8x256xf32>
    %36 = arith.mulf %35, %35 : vector<8x256xf32>
    %cst_26 = arith.constant dense<0.000000e+00> : vector<8xf32>
    %37 = vector.multi_reduction <add>, %36, %cst_26 [1] : vector<8x256xf32> to vector<8xf32>
    %38 = vector.shape_cast %37 : vector<8xf32> to vector<8x1xf32>
    %39 = math.sqrt %38 : vector<8x1xf32>
    %cst_27 = arith.constant 9.99999996E-13 : f32
    %40 = vector.broadcast %cst_27 : f32 to vector<8x1xf32>
    %41 = arith.maximumf %39, %40 : vector<8x1xf32>
    %42 = vector.broadcast %41 : vector<8x1xf32> to vector<8x256xf32>
    %43 = arith.divf %35, %42 : vector<8x256xf32>
    %44 = arith.mulf %21, %43 : vector<8x256xf32>
    %cst_28 = arith.constant dense<0.000000e+00> : vector<8xf32>
    %45 = vector.multi_reduction <add>, %44, %cst_28 [1] : vector<8x256xf32> to vector<8xf32>
    %46 = vector.shape_cast %45 : vector<8xf32> to vector<8x1xf32>
    %47 = vector.shape_cast %46 : vector<8x1xf32> to vector<8x1xf32>
    %48 = vector.broadcast %47 : vector<8x1xf32> to vector<8x128xf32>
    %c0_29 = arith.constant 0 : index
    %c0_30 = arith.constant 0 : index
    %49 = vector.load %arg13[%c0_29, %c0_30] : memref<8x128xf32, #tpu.memory_space<vmem>>, vector<8x128xf32>
    tpu.vector_store %arg13[%c0_29, %c0_30], %48 {strides = array<i32>} : memref<8x128xf32, #tpu.memory_space<vmem>>, vector<8x128xf32>,
    %50 = arith.truncf %21 : vector<8x256xf32> to vector<8x256xbf16>
    %c0_31 = arith.constant 0 : index
    %c0_32 = arith.constant 0 : index
    %51 = vector.load %arg11[%c0_31, %c0_32] : memref<8x256xbf16, #tpu.memory_space<vmem>>, vector<8x256xbf16>
    tpu.vector_store %arg11[%c0_31, %c0_32], %50 {strides = array<i32>} : memref<8x256xbf16, #tpu.memory_space<vmem>>, vector<8x256xbf16>,
    %52 = tpu.transpose %43, [1, 0] : vector<8x256xf32> -> vector<256x8xf32>
    %53 = arith.truncf %52 : vector<256x8xf32> to vector<256x8xbf16>
    %c0_33 = arith.constant 0 : index
    %c0_34 = arith.constant 0 : index
    %54 = vector.load %arg12[%c0_33, %c0_34] : memref<256x8xbf16, #tpu.memory_space<vmem>>, vector<256x8xbf16>
    tpu.vector_store %arg12[%c0_33, %c0_34], %53 {strides = array<i32>} : memref<256x8xbf16, #tpu.memory_space<vmem>>, vector<256x8xbf16>,
    return
  }
  func.func @transform_0(%arg0: i32) -> (i32, i32) {
    %c0_i32 = arith.constant 0 : i32
    %c0_i32_0 = arith.constant 0 : i32
    return %arg0, %c0_i32 : i32, i32
  }
  func.func @transform_1(%arg0: i32) -> (i32, i32) {
    %c0_i32 = arith.constant 0 : i32
    %c0_i32_0 = arith.constant 0 : i32
    return %arg0, %c0_i32 : i32, i32
  }
  func.func @transform_2(%arg0: i32) -> (i32, i32) {
    %c0_i32 = arith.constant 0 : i32
    %c0_i32_0 = arith.constant 0 : i32
    %c0_i32_1 = arith.constant 0 : i32
    return %c0_i32, %c0_i32_0 : i32, i32
  }
  func.func @transform_3(%arg0: i32) -> (i32, i32) {
    %c0_i32 = arith.constant 0 : i32
    %c0_i32_0 = arith.constant 0 : i32
    %c0_i32_1 = arith.constant 0 : i32
    return %c0_i32, %c0_i32_0 : i32, i32
  }
  func.func @transform_4(%arg0: i32) -> (i32, i32) {
    %c0_i32 = arith.constant 0 : i32
    %c0_i32_0 = arith.constant 0 : i32
    %c0_i32_1 = arith.constant 0 : i32
    return %c0_i32, %c0_i32_0 : i32, i32
  }
  func.func @transform_5(%arg0: i32) -> (i32, i32) {
    %c0_i32 = arith.constant 0 : i32
    %c0_i32_0 = arith.constant 0 : i32
    %c0_i32_1 = arith.constant 0 : i32
    return %c0_i32, %c0_i32_0 : i32, i32
  }
  func.func @transform_6(%arg0: i32) -> (i32, i32) {
    %c0_i32 = arith.constant 0 : i32
    %c0_i32_0 = arith.constant 0 : i32
    %c0_i32_1 = arith.constant 0 : i32
    return %c0_i32, %c0_i32_0 : i32, i32
  }
  func.func @transform_7(%arg0: i32) -> (i32, i32) {
    %c0_i32 = arith.constant 0 : i32
    %c0_i32_0 = arith.constant 0 : i32
    %c0_i32_1 = arith.constant 0 : i32
    return %c0_i32, %c0_i32_0 : i32, i32
  }
  func.func @transform_8(%arg0: i32) -> (i32, i32) {
    %c0_i32 = arith.constant 0 : i32
    %c0_i32_0 = arith.constant 0 : i32
    %c0_i32_1 = arith.constant 0 : i32
    return %c0_i32, %c0_i32_0 : i32, i32
  }
  func.func @transform_9(%arg0: i32) -> (i32, i32) {
    %c0_i32 = arith.constant 0 : i32
    %c0_i32_0 = arith.constant 0 : i32
    %c0_i32_1 = arith.constant 0 : i32
    return %c0_i32, %c0_i32_0 : i32, i32
  }
  func.func @transform_10(%arg0: i32) -> (i32, i32) {
    %c0_i32 = arith.constant 0 : i32
    %c0_i32_0 = arith.constant 0 : i32
    return %arg0, %c0_i32 : i32, i32
  }
  func.func @transform_11(%arg0: i32) -> (i32, i32) {
    %c0_i32 = arith.constant 0 : i32
    %c0_i32_0 = arith.constant 0 : i32
    return %c0_i32, %arg0 : i32, i32
  }
  func.func @transform_12(%arg0: i32) -> (i32, i32) {
    %c0_i32 = arith.constant 0 : i32
    %c0_i32_0 = arith.constant 0 : i32
    return %arg0, %c0_i32 : i32, i32
  }
}

</mosaic_0001>

<llo_original>
// kernel: tpu_custom_call.1
$region0: #{tpu_custom_call.1}
  #allocation0 [shape = 'u32[]', space=smem, size = 0x4, offset = 0x4, fixed_abs, tag = 'smem constant byte address 0x4 - core index']
  #allocation1 [shape = 'u32[144,128]{1,0:T(1,128)}', space=vmem, size = 0x12000, scoped, tag = 'internal scratch']
  %s0 = inlined_call_operand.hbm [shape: bf16[8,32], index: 0, kind: input, shape index: {}]
  %s1 = inlined_call_operand.hbm [shape: bf16[8,32], index: 1, kind: input, shape index: {}]
  %s2 = inlined_call_operand.hbm [shape: bf16[32,512], index: 2, kind: input, shape index: {}]
  %s3 = inlined_call_operand.vmem [shape: f32[1,512], index: 3, kind: input, shape index: {}]
  %s4 = inlined_call_operand.hbm [shape: bf16[512,256], index: 4, kind: input, shape index: {}]
  %s5 = inlined_call_operand.vmem [shape: f32[1,256], index: 5, kind: input, shape index: {}]
  %s6 = inlined_call_operand.hbm [shape: bf16[32,512], index: 6, kind: input, shape index: {}]
  %s7 = inlined_call_operand.vmem [shape: f32[1,512], index: 7, kind: input, shape index: {}]
  %s8 = inlined_call_operand.hbm [shape: bf16[512,256], index: 8, kind: input, shape index: {}]
  %s9 = inlined_call_operand.vmem [shape: f32[1,256], index: 9, kind: input, shape index: {}]
  %s10 = inlined_call_operand.hbm [shape: bf16[8,256], index: 10, kind: output, shape index: {0}]
  %s11 = inlined_call_operand.vmem [shape: bf16[256,8], index: 11, kind: output, shape index: {1}]
  %s12 = inlined_call_operand.hbm [shape: f32[8,128], index: 12, kind: output, shape index: {2}]
  %13 = xla_tuple %s10, %s11, %s12
  %s14 = sld [smem:[#allocation0]]
  $region90: #{tpu_custom_call.1} parent=0
    _
  %s16 = ssub.s32 1, %s14
  %s17 = scalar_select 0, %s16, %s14
  $region1: #{tpu_custom_call.1} parent=0
    #allocation2 [shape = 'u8[2048]{0}', space=vmem, size = 0x800, scoped, tag = 'input window, operand 0, single buffered']
    #allocation3 [shape = 's32[1]{0}', space=sflag, size = 0x4, scoped, tag = 'scoped memory for tpu_custom_call.1']
    #allocation4 [shape = 's32[1]{0}', space=sflag, size = 0x4, scoped, tag = 'scoped memory for tpu_custom_call.1']
    #allocation5 [shape = 'u8[2048]{0}', space=vmem, size = 0x800, scoped, tag = 'input window, operand 1, single buffered']
    #allocation6 [shape = 's32[1]{0}', space=sflag, size = 0x4, scoped, tag = 'scoped memory for tpu_custom_call.1']
    #allocation7 [shape = 'u8[32768]{0}', space=vmem, size = 0x8000, scoped, tag = 'input window, operand 2, single buffered']
    #allocation8 [shape = 'u8[262144]{0}', space=vmem, size = 0x40000, scoped, tag = 'input window, operand 4, single buffered']
    #allocation9 [shape = 's32[1]{0}', space=sflag, size = 0x4, scoped, tag = 'scoped memory for tpu_custom_call.1']
    #allocation10 [shape = 'u8[32768]{0}', space=vmem, size = 0x8000, scoped, tag = 'input window, operand 6, single buffered']
    #allocation11 [shape = 'u8[262144]{0}', space=vmem, size = 0x40000, scoped, tag = 'input window, operand 8, single buffered']
    #allocation12 [shape = 's32[1]{0}', space=sflag, size = 0x4, scoped, tag = 'scoped memory for tpu_custom_call.1']
    #allocation13 [shape = 'u8[4096]{0}', space=vmem, size = 0x1000, scoped, tag = 'output window, operand 0, single buffered']
    #allocation14 [shape = 'u8[4096]{0}', space=vmem, size = 0x1000, scoped, tag = 'output window, operand 2, single buffered']
    #allocation15 [shape = 's32[1]{0}', space=sflag, size = 0x4, scoped, tag = 'scoped memory for tpu_custom_call.1']
    %18 = vsyncpa [#allocation3], 0
    %19 = vsyncpa [#allocation6], 0
    %20 = vsyncpa [#allocation9], 0
    %21 = vsyncpa [#allocation12], 0
    %22 = vsyncpa [#allocation4], 0
    %23 = vsyncpa [#allocation15], 0
    // Predicated region
    $region2: #{tpu_custom_call.1} parent=1 // pred_check
      _
    $region3: #{tpu_custom_call.1} parent=1 // pred_check_branch
      %25 = sbr.rel (0) target = $region5
    $region4: #{tpu_custom_call.1} parent=1 // pred_region
      %s27 = ssub.s32 64, 64
      %28 = vsyncadd [#allocation3], %s27
      %s30 = sshll.u32 [#allocation2], 4
      %s31 = int_to_ptr.vmem [resolvable:$true] %s30
      %33 = dma.hbm_to_vmem [thread:$0]  %s0, 64, %s31, [#allocation3]
    $region5: #{tpu_custom_call.1} parent=1 // pred_fallthru
      _
    // Predicated region
    $region6: #{tpu_custom_call.1} parent=1 // pred_check
      _
    $region7: #{tpu_custom_call.1} parent=1 // pred_check_branch
      %35 = sbr.rel (0) target = $region9
    $region8: #{tpu_custom_call.1} parent=1 // pred_region
      %s37 = ssub.s32 64, 64
      %38 = vsyncadd [#allocation6], %s37
      %s40 = sshll.u32 [#allocation5], 4
      %s41 = int_to_ptr.vmem [resolvable:$true] %s40
      %43 = dma.hbm_to_vmem [thread:$0]  %s1, 64, %s41, [#allocation6]
    $region9: #{tpu_custom_call.1} parent=1 // pred_fallthru
      _
    // Predicated region
    $region10: #{tpu_custom_call.1} parent=1 // pred_check
      _
    $region11: #{tpu_custom_call.1} parent=1 // pred_check_branch
      %45 = sbr.rel (0) target = $region13
    $region12: #{tpu_custom_call.1} parent=1 // pred_region
      %s47 = ssub.s32 1024, 1024
      %48 = vsyncadd [#allocation6], %s47
      %s49 = sshll.u32 [#allocation7], 4
      %s50 = int_to_ptr.vmem [resolvable:$true] %s49
      %55 = dma.hbm_to_vmem [thread:$0]  %s2, 1024, %s50, [#allocation6], 256, 256, 16
    $region13: #{tpu_custom_call.1} parent=1 // pred_fallthru
      _
    // Predicated region
    $region14: #{tpu_custom_call.1} parent=1 // pred_check
      _
    $region15: #{tpu_custom_call.1} parent=1 // pred_check_branch
      %57 = sbr.rel (0) target = $region17
    $region16: #{tpu_custom_call.1} parent=1 // pred_region
      _
    $region17: #{tpu_custom_call.1} parent=1 // pred_fallthru
      _
    // Predicated region
    $region18: #{tpu_custom_call.1} parent=1 // pred_check
      _
    $region19: #{tpu_custom_call.1} parent=1 // pred_check_branch
      %59 = sbr.rel (0) target = $region21
    $region20: #{tpu_custom_call.1} parent=1 // pred_region
      %s61 = ssub.s32 8192, 8192
      %62 = vsyncadd [#allocation9], %s61
      %s63 = sshll.u32 [#allocation8], 4
      %s64 = int_to_ptr.vmem [resolvable:$true] %s63
      %69 = dma.hbm_to_vmem [thread:$0]  %s4, 8192, %s64, [#allocation9], 128, 128, 8
    $region21: #{tpu_custom_call.1} parent=1 // pred_fallthru
      _
    // Predicated region
    $region22: #{tpu_custom_call.1} parent=1 // pred_check
      _
    $region23: #{tpu_custom_call.1} parent=1 // pred_check_branch
      %71 = sbr.rel (0) target = $region25
    $region24: #{tpu_custom_call.1} parent=1 // pred_region
      _
    $region25: #{tpu_custom_call.1} parent=1 // pred_fallthru
      _
    // Predicated region
    $region26: #{tpu_custom_call.1} parent=1 // pred_check
      _
    $region27: #{tpu_custom_call.1} parent=1 // pred_check_branch
      %73 = sbr.rel (0) target = $region29
    $region28: #{tpu_custom_call.1} parent=1 // pred_region
      %s75 = ssub.s32 1024, 1024
      %76 = vsyncadd [#allocation9], %s75
      %s77 = sshll.u32 [#allocation10], 4
      %s78 = int_to_ptr.vmem [resolvable:$true] %s77
      %83 = dma.hbm_to_vmem [thread:$0]  %s6, 1024, %s78, [#allocation9], 256, 256, 16
    $region29: #{tpu_custom_call.1} parent=1 // pred_fallthru
      _
    // Predicated region
    $region30: #{tpu_custom_call.1} parent=1 // pred_check
      _
    $region31: #{tpu_custom_call.1} parent=1 // pred_check_branch
      %85 = sbr.rel (0) target = $region33
    $region32: #{tpu_custom_call.1} parent=1 // pred_region
      _
    $region33: #{tpu_custom_call.1} parent=1 // pred_fallthru
      _
    // Predicated region
    $region34: #{tpu_custom_call.1} parent=1 // pred_check
      _
    $region35: #{tpu_custom_call.1} parent=1 // pred_check_branch
      %87 = sbr.rel (0) target = $region37
    $region36: #{tpu_custom_call.1} parent=1 // pred_region
      %s89 = ssub.s32 8192, 8192
      %90 = vsyncadd [#allocation12], %s89
      %s91 = sshll.u32 [#allocation11], 4
      %s92 = int_to_ptr.vmem [resolvable:$true] %s91
      %97 = dma.hbm_to_vmem [thread:$0]  %s8, 8192, %s92, [#allocation12], 128, 128, 8
    $region37: #{tpu_custom_call.1} parent=1 // pred_fallthru
      _
    // Predicated region
    $region38: #{tpu_custom_call.1} parent=1 // pred_check
      _
    $region39: #{tpu_custom_call.1} parent=1 // pred_check_branch
      %99 = sbr.rel (0) target = $region41
    $region40: #{tpu_custom_call.1} parent=1 // pred_region
      _
    $region41: #{tpu_custom_call.1} parent=1 // pred_fallthru
      _
    // Predicated region
    $region42: #{tpu_custom_call.1} parent=1 // pred_check
      _
    $region43: #{tpu_custom_call.1} parent=1 // pred_check_branch
      %101 = sbr.rel (0) target = $region45
    $region44: #{tpu_custom_call.1} parent=1 // pred_region
      %102 = dma.done [#allocation3], 64
    $region45: #{tpu_custom_call.1} parent=1 // pred_fallthru
      _
    // Predicated region
    $region46: #{tpu_custom_call.1} parent=1 // pred_check
      _
    $region47: #{tpu_custom_call.1} parent=1 // pred_check_branch
      %104 = sbr.rel (0) target = $region49
    $region48: #{tpu_custom_call.1} parent=1 // pred_region
      %105 = dma.done [#allocation6], 64
    $region49: #{tpu_custom_call.1} parent=1 // pred_fallthru
      _
    // Predicated region
    $region50: #{tpu_custom_call.1} parent=1 // pred_check
      _
    $region51: #{tpu_custom_call.1} parent=1 // pred_check_branch
      %107 = sbr.rel (0) target = $region53
    $region52: #{tpu_custom_call.1} parent=1 // pred_region
      %108 = dma.done [#allocation6], 1024
    $region53: #{tpu_custom_call.1} parent=1 // pred_fallthru
      _
    // Predicated region
    $region54: #{tpu_custom_call.1} parent=1 // pred_check
      _
    $region55: #{tpu_custom_call.1} parent=1 // pred_check_branch
      %110 = sbr.rel (0) target = $region57
    $region56: #{tpu_custom_call.1} parent=1 // pred_region
      %111 = dma.done [#allocation9], 8192
    $region57: #{tpu_custom_call.1} parent=1 // pred_fallthru
      _
    // Predicated region
    $region58: #{tpu_custom_call.1} parent=1 // pred_check
      _
    $region59: #{tpu_custom_call.1} parent=1 // pred_check_branch
      %113 = sbr.rel (0) target = $region61
    $region60: #{tpu_custom_call.1} parent=1 // pred_region
      %114 = dma.done [#allocation9], 1024
    $region61: #{tpu_custom_call.1} parent=1 // pred_fallthru
      _
    // Predicated region
    $region62: #{tpu_custom_call.1} parent=1 // pred_check
      _
    $region63: #{tpu_custom_call.1} parent=1 // pred_check_branch
      %116 = sbr.rel (0) target = $region65
    $region64: #{tpu_custom_call.1} parent=1 // pred_region
      %117 = dma.done [#allocation12], 8192
    $region65: #{tpu_custom_call.1} parent=1 // pred_fallthru
      _
    %v119 = vld [vmem:[#allocation2] sm:$0xf]
    %v120 = vld [vmem:[#allocation7] sm:$0xff]
    %v121 = vld [vmem:[#allocation7 + $0x8] sm:$0xff]
    %v122 = vld [vmem:[#allocation7 + $0x10] sm:$0xff]
    %v123 = vld [vmem:[#allocation7 + $0x18] sm:$0xff]
    %v124 = vld [vmem:[#allocation7 + $0x20] sm:$0xff]
    %v125 = vld [vmem:[#allocation7 + $0x28] sm:$0xff]
    %v126 = vld [vmem:[#allocation7 + $0x30] sm:$0xff]
    %v127 = vld [vmem:[#allocation7 + $0x38] sm:$0xff]
    %v128 = vld [vmem:[%s3] sm:$0xf]
    %v130 = vlaneseq
    %v131 = vshrl.u32 %v130, 7
    %v132 = vsub.s32 0, %v131
    %v133 = vrot.slane %v128, %v132
    %v134 = vlaneseq
    %v135 = vshrl.u32 %v134, 7
    %v136 = vsub.s32 1, %v135
    %v137 = vrot.slane %v128, %v136
    %v138 = vlaneseq
    %v139 = vshrl.u32 %v138, 7
    %v140 = vsub.s32 2, %v139
    %v141 = vrot.slane %v128, %v140
    %v142 = vlaneseq
    %v143 = vshrl.u32 %v142, 7
    %v144 = vsub.s32 3, %v143
    %v145 = vrot.slane %v128, %v144
    %v158 = vunpack.c.l.b16 %v120
    %v159 = vunpack.c.h.b16 %v120
    %v160 = vunpack.c.l.b16 %v121
    %v161 = vunpack.c.h.b16 %v121
    %v162 = vunpack.c.l.b16 %v122
    %v163 = vunpack.c.h.b16 %v122
    %v164 = vunpack.c.l.b16 %v123
    %v165 = vunpack.c.h.b16 %v123
    %v166 = vunpack.c.l.b16 %v124
    %v167 = vunpack.c.h.b16 %v124
    %v168 = vunpack.c.l.b16 %v125
    %v169 = vunpack.c.h.b16 %v125
    %v170 = vunpack.c.l.b16 %v126
    %v171 = vunpack.c.h.b16 %v126
    %v172 = vunpack.c.l.b16 %v127
    %v173 = vunpack.c.h.b16 %v127
    %v174 = vpack.c.b16 %v162, %v158
    %v175 = vpack.c.b16 %v163, %v159
    %v176 = vpack.c.b16 %v164, %v160
    %v177 = vpack.c.b16 %v165, %v161
    %v178 = vpack.c.b16 %v170, %v166
    %v179 = vpack.c.b16 %v171, %v167
    %v180 = vpack.c.b16 %v172, %v168
    %v181 = vpack.c.b16 %v173, %v169
    %vm190 = vcmask 261120
    %v192 = vsel %vm190, %v119, 0
    %194 = vmatprep.subr.bf16.mxu0 %v175
    %195 = vmatpush1.bf16.msra.mxu0 %v174
    %196 = vmatprep.subr.bf16.mxu0 %v179
    %197 = vmatpush1.bf16.msra.mxu0 %v178
    %198 = vmatprep.subr.bf16.mxu0 0
    %199 = vmatpush1.bf16.msra.mxu0 0
    %200 = vmatprep.subr.bf16.mxu0 0
    %201 = vmatpush1.bf16.msra.mxu0 0
    %202 = vmatprep.subr.bf16.mxu0 0
    %203 = vmatpush1.bf16.msra.mxu0 0
    %204 = vmatprep.subr.bf16.mxu0 0
    %205 = vmatpush1.bf16.msra.mxu0 0
    %206 = vmatprep.subr.bf16.mxu0 0
    %207 = vmatpush1.bf16.msra.mxu0 0
    %208 = vmatprep.subr.bf16.mxu0 0
    %209 = vmatpush1.bf16.msra.mxu0 0
    %210 = vmatprep.subr.bf16.mxu0 0
    %211 = vmatpush1.bf16.msra.mxu0 0
    %212 = vmatprep.subr.bf16.mxu0 0
    %213 = vmatpush1.bf16.msra.mxu0 0
    %214 = vmatprep.subr.bf16.mxu0 0
    %215 = vmatpush1.bf16.msra.mxu0 0
    %216 = vmatprep.subr.bf16.mxu0 0
    %217 = vmatpush1.bf16.msra.mxu0 0
    %218 = vmatprep.subr.bf16.mxu0 0
    %219 = vmatpush1.bf16.msra.mxu0 0
    %220 = vmatprep.subr.bf16.mxu0 0
    %221 = vmatpush1.bf16.msra.mxu0 0
    %222 = vmatprep.subr.bf16.mxu0 0
    %223 = vmatpush1.bf16.msra.mxu0 0
    %224 = vmatprep.subr.bf16.mxu0 0
    %225 = vmatpush1.bf16.msra.mxu0 0
    %226 = vmatprep.mubr.bf16.mxu0 0
    %227 = vmatmul.mubr.bf16.gmra.mrb[0].mxu0 %v192
    %v228 = vpop.f32.mrb[0].mxu0
    %v229 = vadd.f32 %v133, %v228
    %v230 = vpop.f32.mrb[0].mxu0
    %v231 = vadd.f32 %v137, %v230
    %v232 = vpop.f32.mrb[0].mxu0
    %v233 = vpop.f32.mrb[0].mxu0
    %234 = vdwg.mxu0
    %235 = vmatprep.subr.bf16.mxu0 %v177
    %236 = vmatpush1.bf16.msra.mxu0 %v176
    %237 = vmatprep.subr.bf16.mxu0 %v181
    %238 = vmatpush1.bf16.msra.mxu0 %v180
    %239 = vmatprep.subr.bf16.mxu0 0
    %240 = vmatpush1.bf16.msra.mxu0 0
    %241 = vmatprep.subr.bf16.mxu0 0
    %242 = vmatpush1.bf16.msra.mxu0 0
    %243 = vmatprep.subr.bf16.mxu0 0
    %244 = vmatpush1.bf16.msra.mxu0 0
    %245 = vmatprep.subr.bf16.mxu0 0
    %246 = vmatpush1.bf16.msra.mxu0 0
    %247 = vmatprep.subr.bf16.mxu0 0
    %248 = vmatpush1.bf16.msra.mxu0 0
    %249 = vmatprep.subr.bf16.mxu0 0
    %250 = vmatpush1.bf16.msra.mxu0 0
    %251 = vmatprep.subr.bf16.mxu0 0
    %252 = vmatpush1.bf16.msra.mxu0 0
    %253 = vmatprep.subr.bf16.mxu0 0
    %254 = vmatpush1.bf16.msra.mxu0 0
    %255 = vmatprep.subr.bf16.mxu0 0
    %256 = vmatpush1.bf16.msra.mxu0 0
    %257 = vmatprep.subr.bf16.mxu0 0
    %258 = vmatpush1.bf16.msra.mxu0 0
    %259 = vmatprep.subr.bf16.mxu0 0
    %260 = vmatpush1.bf16.msra.mxu0 0
    %261 = vmatprep.subr.bf16.mxu0 0
    %262 = vmatpush1.bf16.msra.mxu0 0
    %263 = vmatprep.subr.bf16.mxu0 0
    %264 = vmatpush1.bf16.msra.mxu0 0
    %265 = vmatprep.subr.bf16.mxu0 0
    %266 = vmatpush1.bf16.msra.mxu0 0
    %267 = vmatprep.mubr.bf16.mxu0 0
    %268 = vmatmul.mubr.bf16.gmra.mrb[0].mxu0 %v192
    %v269 = vpop.f32.mrb[0].mxu0
    %v270 = vadd.f32 %v141, %v269
    %v271 = vpop.f32.mrb[0].mxu0
    %v272 = vadd.f32 %v145, %v271
    %v273 = vpop.f32.mrb[0].mxu0
    %v274 = vpop.f32.mrb[0].mxu0
    %275 = vdwg.mxu0
    %v276 = vmax.f32 %v229, 0.0
    %v277 = vmax.f32 %v231, 0.0
    %v278 = vmax.f32 %v270, 0.0
    %v279 = vmax.f32 %v272, 0.0
    %v280 = vpack.c.bf16 %v276, %v276
    %v281 = vpack.c.bf16 %v277, %v277
    %v282 = vpack.c.bf16 %v278, %v278
    %v283 = vpack.c.bf16 %v279, %v279
    %v284 = vld [vmem:[#allocation8] sm:$0xff]
    %v285 = vld [vmem:[#allocation8 + $0x8] sm:$0xff]
    %v286 = vld [vmem:[#allocation8 + $0x10] sm:$0xff]
    %v287 = vld [vmem:[#allocation8 + $0x18] sm:$0xff]
    %v288 = vld [vmem:[#allocation8 + $0x20] sm:$0xff]
    %v289 = vld [vmem:[#allocation8 + $0x28] sm:$0xff]
    %v290 = vld [vmem:[#allocation8 + $0x30] sm:$0xff]
    %v291 = vld [vmem:[#allocation8 + $0x38] sm:$0xff]
    %v292 = vld [vmem:[#allocation8 + $0x40] sm:$0xff]
    %v293 = vld [vmem:[#allocation8 + $0x48] sm:$0xff]
    %v294 = vld [vmem:[#allocation8 + $0x50] sm:$0xff]
    %v295 = vld [vmem:[#allocation8 + $0x58] sm:$0xff]
    %v296 = vld [vmem:[#allocation8 + $0x60] sm:$0xff]
    %v297 = vld [vmem:[#allocation8 + $0x68] sm:$0xff]
    %v298 = vld [vmem:[#allocation8 + $0x70] sm:$0xff]
    %v299 = vld [vmem:[#allocation8 + $0x78] sm:$0xff]
    %v300 = vld [vmem:[#allocation8 + $0x80] sm:$0xff]
    %v301 = vld [vmem:[#allocation8 + $0x88] sm:$0xff]
    %v302 = vld [vmem:[#allocation8 + $0x90] sm:$0xff]
    %v303 = vld [vmem:[#allocation8 + $0x98] sm:$0xff]
    %v304 = vld [vmem:[#allocation8 + $0xa0] sm:$0xff]
    %v305 = vld [vmem:[#allocation8 + $0xa8] sm:$0xff]
    %v306 = vld [vmem:[#allocation8 + $0xb0] sm:$0xff]
    %v307 = vld [vmem:[#allocation8 + $0xb8] sm:$0xff]
    %v308 = vld [vmem:[#allocation8 + $0xc0] sm:$0xff]
    %v309 = vld [vmem:[#allocation8 + $0xc8] sm:$0xff]
    %v310 = vld [vmem:[#allocation8 + $0xd0] sm:$0xff]
    %v311 = vld [vmem:[#allocation8 + $0xd8] sm:$0xff]
    %v312 = vld [vmem:[#allocation8 + $0xe0] sm:$0xff]
    %v313 = vld [vmem:[#allocation8 + $0xe8] sm:$0xff]
    %v314 = vld [vmem:[#allocation8 + $0xf0] sm:$0xff]
    %v315 = vld [vmem:[#allocation8 + $0xf8] sm:$0xff]
    %v316 = vld [vmem:[#allocation8 + $0x100] sm:$0xff]
    %v317 = vld [vmem:[#allocation8 + $0x108] sm:$0xff]
    %v318 = vld [vmem:[#allocation8 + $0x110] sm:$0xff]
    %v319 = vld [vmem:[#allocation8 + $0x118] sm:$0xff]
    %v320 = vld [vmem:[#allocation8 + $0x120] sm:$0xff]
    %v321 = vld [vmem:[#allocation8 + $0x128] sm:$0xff]
    %v322 = vld [vmem:[#allocation8 + $0x130] sm:$0xff]
    %v323 = vld [vmem:[#allocation8 + $0x138] sm:$0xff]
    %v324 = vld [vmem:[#allocation8 + $0x140] sm:$0xff]
    %v325 = vld [vmem:[#allocation8 + $0x148] sm:$0xff]
    %v326 = vld [vmem:[#allocation8 + $0x150] sm:$0xff]
    %v327 = vld [vmem:[#allocation8 + $0x158] sm:$0xff]
    %v328 = vld [vmem:[#allocation8 + $0x160] sm:$0xff]
    %v329 = vld [vmem:[#allocation8 + $0x168] sm:$0xff]
    %v330 = vld [vmem:[#allocation8 + $0x170] sm:$0xff]
    %v331 = vld [vmem:[#allocation8 + $0x178] sm:$0xff]
    %v332 = vld [vmem:[#allocation8 + $0x180] sm:$0xff]
    %v333 = vld [vmem:[#allocation8 + $0x188] sm:$0xff]
    %v334 = vld [vmem:[#allocation8 + $0x190] sm:$0xff]
    %v335 = vld [vmem:[#allocation8 + $0x198] sm:$0xff]
    %v336 = vld [vmem:[#allocation8 + $0x1a0] sm:$0xff]
    %v337 = vld [vmem:[#allocation8 + $0x1a8] sm:$0xff]
    %v338 = vld [vmem:[#allocation8 + $0x1b0] sm:$0xff]
    %v339 = vld [vmem:[#allocation8 + $0x1b8] sm:$0xff]
    %v340 = vld [vmem:[#allocation8 + $0x1c0] sm:$0xff]
    %v341 = vld [vmem:[#allocation8 + $0x1c8] sm:$0xff]
    %v342 = vld [vmem:[#allocation8 + $0x1d0] sm:$0xff]
    %v343 = vld [vmem:[#allocation8 + $0x1d8] sm:$0xff]
    %v344 = vld [vmem:[#allocation8 + $0x1e0] sm:$0xff]
    %v345 = vld [vmem:[#allocation8 + $0x1e8] sm:$0xff]
    %v346 = vld [vmem:[#allocation8 + $0x1f0] sm:$0xff]
    %v347 = vld [vmem:[#allocation8 + $0x1f8] sm:$0xff]
    %v348 = vld [vmem:[%s5] sm:$0x3]
    %v350 = vlaneseq
    %v351 = vshrl.u32 %v350, 7
    %v352 = vsub.s32 0, %v351
    %v353 = vrot.slane %v348, %v352
    %v354 = vlaneseq
    %v355 = vshrl.u32 %v354, 7
    %v356 = vsub.s32 1, %v355
    %v357 = vrot.slane %v348, %v356
    %v424 = vunpack.c.l.b16 %v284
    %v425 = vunpack.c.h.b16 %v284
    %v426 = vunpack.c.l.b16 %v285
    %v427 = vunpack.c.h.b16 %v285
    %v428 = vunpack.c.l.b16 %v286
    %v429 = vunpack.c.h.b16 %v286
    %v430 = vunpack.c.l.b16 %v287
    %v431 = vunpack.c.h.b16 %v287
    %v432 = vunpack.c.l.b16 %v288
    %v433 = vunpack.c.h.b16 %v288
    %v434 = vunpack.c.l.b16 %v289
    %v435 = vunpack.c.h.b16 %v289
    %v436 = vunpack.c.l.b16 %v290
    %v437 = vunpack.c.h.b16 %v290
    %v438 = vunpack.c.l.b16 %v291
    %v439 = vunpack.c.h.b16 %v291
    %v440 = vunpack.c.l.b16 %v292
    %v441 = vunpack.c.h.b16 %v292
    %v442 = vunpack.c.l.b16 %v293
    %v443 = vunpack.c.h.b16 %v293
    %v444 = vunpack.c.l.b16 %v294
    %v445 = vunpack.c.h.b16 %v294
    %v446 = vunpack.c.l.b16 %v295
    %v447 = vunpack.c.h.b16 %v295
    %v448 = vunpack.c.l.b16 %v296
    %v449 = vunpack.c.h.b16 %v296
    %v450 = vunpack.c.l.b16 %v297
    %v451 = vunpack.c.h.b16 %v297
    %v452 = vunpack.c.l.b16 %v298
    %v453 = vunpack.c.h.b16 %v298
    %v454 = vunpack.c.l.b16 %v299
    %v455 = vunpack.c.h.b16 %v299
    %v456 = vunpack.c.l.b16 %v300
    %v457 = vunpack.c.h.b16 %v300
    %v458 = vunpack.c.l.b16 %v301
    %v459 = vunpack.c.h.b16 %v301
    %v460 = vunpack.c.l.b16 %v302
    %v461 = vunpack.c.h.b16 %v302
    %v462 = vunpack.c.l.b16 %v303
    %v463 = vunpack.c.h.b16 %v303
    %v464 = vunpack.c.l.b16 %v304
    %v465 = vunpack.c.h.b16 %v304
    %v466 = vunpack.c.l.b16 %v305
    %v467 = vunpack.c.h.b16 %v305
    %v468 = vunpack.c.l.b16 %v306
    %v469 = vunpack.c.h.b16 %v306
    %v470 = vunpack.c.l.b16 %v307
    %v471 = vunpack.c.h.b16 %v307
    %v472 = vunpack.c.l.b16 %v308
    %v473 = vunpack.c.h.b16 %v308
    %v474 = vunpack.c.l.b16 %v309
    %v475 = vunpack.c.h.b16 %v309
    %v476 = vunpack.c.l.b16 %v310
    %v477 = vunpack.c.h.b16 %v310
    %v478 = vunpack.c.l.b16 %v311
    %v479 = vunpack.c.h.b16 %v311
    %v480 = vunpack.c.l.b16 %v312
    %v481 = vunpack.c.h.b16 %v312
    %v482 = vunpack.c.l.b16 %v313
    %v483 = vunpack.c.h.b16 %v313
    %v484 = vunpack.c.l.b16 %v314
    %v485 = vunpack.c.h.b16 %v314
    %v486 = vunpack.c.l.b16 %v315
    %v487 = vunpack.c.h.b16 %v315
    %v488 = vunpack.c.l.b16 %v316
    %v489 = vunpack.c.h.b16 %v316
    %v490 = vunpack.c.l.b16 %v317
    %v491 = vunpack.c.h.b16 %v317
    %v492 = vunpack.c.l.b16 %v318
    %v493 = vunpack.c.h.b16 %v318
    %v494 = vunpack.c.l.b16 %v319
    %v495 = vunpack.c.h.b16 %v319
    %v496 = vunpack.c.l.b16 %v320
    %v497 = vunpack.c.h.b16 %v320
    %v498 = vunpack.c.l.b16 %v321
    %v499 = vunpack.c.h.b16 %v321
    %v500 = vunpack.c.l.b16 %v322
    %v501 = vunpack.c.h.b16 %v322
    %v502 = vunpack.c.l.b16 %v323
    %v503 = vunpack.c.h.b16 %v323
    %v504 = vunpack.c.l.b16 %v324
    %v505 = vunpack.c.h.b16 %v324
    %v506 = vunpack.c.l.b16 %v325
    %v507 = vunpack.c.h.b16 %v325
    %v508 = vunpack.c.l.b16 %v326
    %v509 = vunpack.c.h.b16 %v326
    %v510 = vunpack.c.l.b16 %v327
    %v511 = vunpack.c.h.b16 %v327
    %v512 = vunpack.c.l.b16 %v328
    %v513 = vunpack.c.h.b16 %v328
    %v514 = vunpack.c.l.b16 %v329
    %v515 = vunpack.c.h.b16 %v329
    %v516 = vunpack.c.l.b16 %v330
    %v517 = vunpack.c.h.b16 %v330
    %v518 = vunpack.c.l.b16 %v331
    %v519 = vunpack.c.h.b16 %v331
    %v520 = vunpack.c.l.b16 %v332
    %v521 = vunpack.c.h.b16 %v332
    %v522 = vunpack.c.l.b16 %v333
    %v523 = vunpack.c.h.b16 %v333
    %v524 = vunpack.c.l.b16 %v334
    %v525 = vunpack.c.h.b16 %v334
    %v526 = vunpack.c.l.b16 %v335
    %v527 = vunpack.c.h.b16 %v335
    %v528 = vunpack.c.l.b16 %v336
    %v529 = vunpack.c.h.b16 %v336
    %v530 = vunpack.c.l.b16 %v337
    %v531 = vunpack.c.h.b16 %v337
    %v532 = vunpack.c.l.b16 %v338
    %v533 = vunpack.c.h.b16 %v338
    %v534 = vunpack.c.l.b16 %v339
    %v535 = vunpack.c.h.b16 %v339
    %v536 = vunpack.c.l.b16 %v340
    %v537 = vunpack.c.h.b16 %v340
    %v538 = vunpack.c.l.b16 %v341
    %v539 = vunpack.c.h.b16 %v341
    %v540 = vunpack.c.l.b16 %v342
    %v541 = vunpack.c.h.b16 %v342
    %v542 = vunpack.c.l.b16 %v343
    %v543 = vunpack.c.h.b16 %v343
    %v544 = vunpack.c.l.b16 %v344
    %v545 = vunpack.c.h.b16 %v344
    %v546 = vunpack.c.l.b16 %v345
    %v547 = vunpack.c.h.b16 %v345
    %v548 = vunpack.c.l.b16 %v346
    %v549 = vunpack.c.h.b16 %v346
    %v550 = vunpack.c.l.b16 %v347
    %v551 = vunpack.c.h.b16 %v347
    %v552 = vpack.c.b16 %v426, %v424
    %v553 = vpack.c.b16 %v427, %v425
    %v554 = vpack.c.b16 %v430, %v428
    %v555 = vpack.c.b16 %v431, %v429
    %v556 = vpack.c.b16 %v434, %v432
    %v557 = vpack.c.b16 %v435, %v433
    %v558 = vpack.c.b16 %v438, %v436
    %v559 = vpack.c.b16 %v439, %v437
    %v560 = vpack.c.b16 %v442, %v440
    %v561 = vpack.c.b16 %v443, %v441
    %v562 = vpack.c.b16 %v446, %v444
    %v563 = vpack.c.b16 %v447, %v445
    %v564 = vpack.c.b16 %v450, %v448
    %v565 = vpack.c.b16 %v451, %v449
    %v566 = vpack.c.b16 %v454, %v452
    %v567 = vpack.c.b16 %v455, %v453
    %v568 = vpack.c.b16 %v458, %v456
    %v569 = vpack.c.b16 %v459, %v457
    %v570 = vpack.c.b16 %v462, %v460
    %v571 = vpack.c.b16 %v463, %v461
    %v572 = vpack.c.b16 %v466, %v464
    %v573 = vpack.c.b16 %v467, %v465
    %v574 = vpack.c.b16 %v470, %v468
    %v575 = vpack.c.b16 %v471, %v469
    %v576 = vpack.c.b16 %v474, %v472
    %v577 = vpack.c.b16 %v475, %v473
    %v578 = vpack.c.b16 %v478, %v476
    %v579 = vpack.c.b16 %v479, %v477
    %v580 = vpack.c.b16 %v482, %v480
    %v581 = vpack.c.b16 %v483, %v481
    %v582 = vpack.c.b16 %v486, %v484
    %v583 = vpack.c.b16 %v487, %v485
    %v584 = vpack.c.b16 %v490, %v488
    %v585 = vpack.c.b16 %v491, %v489
    %v586 = vpack.c.b16 %v494, %v492
    %v587 = vpack.c.b16 %v495, %v493
    %v588 = vpack.c.b16 %v498, %v496
    %v589 = vpack.c.b16 %v499, %v497
    %v590 = vpack.c.b16 %v502, %v500
    %v591 = vpack.c.b16 %v503, %v501
    %v592 = vpack.c.b16 %v506, %v504
    %v593 = vpack.c.b16 %v507, %v505
    %v594 = vpack.c.b16 %v510, %v508
    %v595 = vpack.c.b16 %v511, %v509
    %v596 = vpack.c.b16 %v514, %v512
    %v597 = vpack.c.b16 %v515, %v513
    %v598 = vpack.c.b16 %v518, %v516
    %v599 = vpack.c.b16 %v519, %v517
    %v600 = vpack.c.b16 %v522, %v520
    %v601 = vpack.c.b16 %v523, %v521
    %v602 = vpack.c.b16 %v526, %v524
    %v603 = vpack.c.b16 %v527, %v525
    %v604 = vpack.c.b16 %v530, %v528
    %v605 = vpack.c.b16 %v531, %v529
    %v606 = vpack.c.b16 %v534, %v532
    %v607 = vpack.c.b16 %v535, %v533
    %v608 = vpack.c.b16 %v538, %v536
    %v609 = vpack.c.b16 %v539, %v537
    %v610 = vpack.c.b16 %v542, %v540
    %v611 = vpack.c.b16 %v543, %v541
    %v612 = vpack.c.b16 %v546, %v544
    %v613 = vpack.c.b16 %v547, %v545
    %v614 = vpack.c.b16 %v550, %v548
    %v615 = vpack.c.b16 %v551, %v549
    %680 = vmatprep.subr.bf16.mxu0 %v553
    %681 = vmatpush1.bf16.msra.mxu0 %v552
    %682 = vmatprep.subr.bf16.mxu0 %v555
    %683 = vmatpush1.bf16.msra.mxu0 %v554
    %684 = vmatprep.subr.bf16.mxu0 %v557
    %685 = vmatpush1.bf16.msra.mxu0 %v556
    %686 = vmatprep.subr.bf16.mxu0 %v559
    %687 = vmatpush1.bf16.msra.mxu0 %v558
    %688 = vmatprep.subr.bf16.mxu0 %v561
    %689 = vmatpush1.bf16.msra.mxu0 %v560
    %690 = vmatprep.subr.bf16.mxu0 %v563
    %691 = vmatpush1.bf16.msra.mxu0 %v562
    %692 = vmatprep.subr.bf16.mxu0 %v565
    %693 = vmatpush1.bf16.msra.mxu0 %v564
    %694 = vmatprep.subr.bf16.mxu0 %v567
    %695 = vmatpush1.bf16.msra.mxu0 %v566
    %696 = vmatprep.subr.bf16.mxu0 %v569
    %697 = vmatpush1.bf16.msra.mxu0 %v568
    %698 = vmatprep.subr.bf16.mxu0 %v571
    %699 = vmatpush1.bf16.msra.mxu0 %v570
    %700 = vmatprep.subr.bf16.mxu0 %v573
    %701 = vmatpush1.bf16.msra.mxu0 %v572
    %702 = vmatprep.subr.bf16.mxu0 %v575
    %703 = vmatpush1.bf16.msra.mxu0 %v574
    %704 = vmatprep.subr.bf16.mxu0 %v577
    %705 = vmatpush1.bf16.msra.mxu0 %v576
    %706 = vmatprep.subr.bf16.mxu0 %v579
    %707 = vmatpush1.bf16.msra.mxu0 %v578
    %708 = vmatprep.subr.bf16.mxu0 %v581
    %709 = vmatpush1.bf16.msra.mxu0 %v580
    %710 = vmatprep.subr.bf16.mxu0 %v583
    %711 = vmatpush1.bf16.msra.mxu0 %v582
    %712 = vmatprep.mubr.bf16.mxu0 %v281
    %713 = vmatmul.mubr.bf16.gmra.mrb[0].mxu0 %v280
    %v714 = vpop.f32.mrb[0].mxu0
    %v715 = vadd.f32 %v353, %v714
    %v716 = vpop.f32.mrb[0].mxu0
    %v717 = vadd.f32 %v357, %v716
    %v718 = vpop.f32.mrb[0].mxu0
    %v719 = vpop.f32.mrb[0].mxu0
    %720 = vdwg.mxu0
    %721 = vmatprep.subr.bf16.mxu0 %v585
    %722 = vmatpush1.bf16.msra.mxu0 %v584
    %723 = vmatprep.subr.bf16.mxu0 %v587
    %724 = vmatpush1.bf16.msra.mxu0 %v586
    %725 = vmatprep.subr.bf16.mxu0 %v589
    %726 = vmatpush1.bf16.msra.mxu0 %v588
    %727 = vmatprep.subr.bf16.mxu0 %v591
    %728 = vmatpush1.bf16.msra.mxu0 %v590
    %729 = vmatprep.subr.bf16.mxu0 %v593
    %730 = vmatpush1.bf16.msra.mxu0 %v592
    %731 = vmatprep.subr.bf16.mxu0 %v595
    %732 = vmatpush1.bf16.msra.mxu0 %v594
    %733 = vmatprep.subr.bf16.mxu0 %v597
    %734 = vmatpush1.bf16.msra.mxu0 %v596
    %735 = vmatprep.subr.bf16.mxu0 %v599
    %736 = vmatpush1.bf16.msra.mxu0 %v598
    %737 = vmatprep.subr.bf16.mxu0 %v601
    %738 = vmatpush1.bf16.msra.mxu0 %v600
    %739 = vmatprep.subr.bf16.mxu0 %v603
    %740 = vmatpush1.bf16.msra.mxu0 %v602
    %741 = vmatprep.subr.bf16.mxu0 %v605
    %742 = vmatpush1.bf16.msra.mxu0 %v604
    %743 = vmatprep.subr.bf16.mxu0 %v607
    %744 = vmatpush1.bf16.msra.mxu0 %v606
    %745 = vmatprep.subr.bf16.mxu0 %v609
    %746 = vmatpush1.bf16.msra.mxu0 %v608
    %747 = vmatprep.subr.bf16.mxu0 %v611
    %748 = vmatpush1.bf16.msra.mxu0 %v610
    %749 = vmatprep.subr.bf16.mxu0 %v613
    %750 = vmatpush1.bf16.msra.mxu0 %v612
    %751 = vmatprep.subr.bf16.mxu0 %v615
    %752 = vmatpush1.bf16.msra.mxu0 %v614
    %753 = vmatprep.mubr.bf16.mxu0 %v283
    %754 = vmatmul.mubr.bf16.gmra.mrb[0].mxu0 %v282
    %v755 = vpop.f32.mrb[0].mxu0
    %v756 = vadd.f32 %v715, %v755
    %v757 = vpop.f32.mrb[0].mxu0
    %v758 = vadd.f32 %v717, %v757
    %v759 = vpop.f32.mrb[0].mxu0
    %v760 = vpop.f32.mrb[0].mxu0
    %761 = vdwg.mxu0
    %v762 = vmul.f32 %v756, %v756
    %v763 = vmul.f32 %v758, %v758
    %v764 = vadd.f32 %v762, %v763
    %765 = vadd.xlane.f32.xlu0 %v764
    %v766 = vpop.xlane.xlu0 %765
    %v767 = vrsqrt.pop %v766
    %v768 = vmul.f32 %v766, %v767
    %vm769 = vcmp.eq.f32.partialorder %v766, inf
    %v770 = vsel %vm769, %v766, %v768
    %vm771 = vcmp.eq.f32.partialorder %v766, 0.0
    %v772 = vand.u32 %v766, 2147483648
    %v773 = vsel %vm771, %v772, %v770
    %v774 = vmax.f32 %v773, 1e-12
    %v775 = vrcp.pop %v774
    %v776 = vmul.f32 %v756, %v775
    %v777 = vmul.f32 %v758, %v775
    %v778 = vld [vmem:[#allocation5] sm:$0xf]
    %v779 = vld [vmem:[#allocation10] sm:$0xff]
    %v780 = vld [vmem:[#allocation10 + $0x8] sm:$0xff]
    %v781 = vld [vmem:[#allocation10 + $0x10] sm:$0xff]
    %v782 = vld [vmem:[#allocation10 + $0x18] sm:$0xff]
    %v783 = vld [vmem:[#allocation10 + $0x20] sm:$0xff]
    %v784 = vld [vmem:[#allocation10 + $0x28] sm:$0xff]
    %v785 = vld [vmem:[#allocation10 + $0x30] sm:$0xff]
    %v786 = vld [vmem:[#allocation10 + $0x38] sm:$0xff]
    %v787 = vld [vmem:[%s7] sm:$0xf]
    %v789 = vlaneseq
    %v790 = vshrl.u32 %v789, 7
    %v791 = vsub.s32 0, %v790
    %v792 = vrot.slane %v787, %v791
    %v793 = vlaneseq
    %v794 = vshrl.u32 %v793, 7
    %v795 = vsub.s32 1, %v794
    %v796 = vrot.slane %v787, %v795
    %v797 = vlaneseq
    %v798 = vshrl.u32 %v797, 7
    %v799 = vsub.s32 2, %v798
    %v800 = vrot.slane %v787, %v799
    %v801 = vlaneseq
    %v802 = vshrl.u32 %v801, 7
    %v803 = vsub.s32 3, %v802
    %v804 = vrot.slane %v787, %v803
    %v817 = vunpack.c.l.b16 %v779
    %v818 = vunpack.c.h.b16 %v779
    %v819 = vunpack.c.l.b16 %v780
    %v820 = vunpack.c.h.b16 %v780
    %v821 = vunpack.c.l.b16 %v781
    %v822 = vunpack.c.h.b16 %v781
    %v823 = vunpack.c.l.b16 %v782
    %v824 = vunpack.c.h.b16 %v782
    %v825 = vunpack.c.l.b16 %v783
    %v826 = vunpack.c.h.b16 %v783
    %v827 = vunpack.c.l.b16 %v784
    %v828 = vunpack.c.h.b16 %v784
    %v829 = vunpack.c.l.b16 %v785
    %v830 = vunpack.c.h.b16 %v785
    %v831 = vunpack.c.l.b16 %v786
    %v832 = vunpack.c.h.b16 %v786
    %v833 = vpack.c.b16 %v821, %v817
    %v834 = vpack.c.b16 %v822, %v818
    %v835 = vpack.c.b16 %v823, %v819
    %v836 = vpack.c.b16 %v824, %v820
    %v837 = vpack.c.b16 %v829, %v825
    %v838 = vpack.c.b16 %v830, %v826
    %v839 = vpack.c.b16 %v831, %v827
    %v840 = vpack.c.b16 %v832, %v828
    %v850 = vsel %vm190, %v778, 0
    %852 = vmatprep.subr.bf16.mxu0 %v834
    %853 = vmatpush1.bf16.msra.mxu0 %v833
    %854 = vmatprep.subr.bf16.mxu0 %v838
    %855 = vmatpush1.bf16.msra.mxu0 %v837
    %856 = vmatprep.subr.bf16.mxu0 0
    %857 = vmatpush1.bf16.msra.mxu0 0
    %858 = vmatprep.subr.bf16.mxu0 0
    %859 = vmatpush1.bf16.msra.mxu0 0
    %860 = vmatprep.subr.bf16.mxu0 0
    %861 = vmatpush1.bf16.msra.mxu0 0
    %862 = vmatprep.subr.bf16.mxu0 0
    %863 = vmatpush1.bf16.msra.mxu0 0
    %864 = vmatprep.subr.bf16.mxu0 0
    %865 = vmatpush1.bf16.msra.mxu0 0
    %866 = vmatprep.subr.bf16.mxu0 0
    %867 = vmatpush1.bf16.msra.mxu0 0
    %868 = vmatprep.subr.bf16.mxu0 0
    %869 = vmatpush1.bf16.msra.mxu0 0
    %870 = vmatprep.subr.bf16.mxu0 0
    %871 = vmatpush1.bf16.msra.mxu0 0
    %872 = vmatprep.subr.bf16.mxu0 0
    %873 = vmatpush1.bf16.msra.mxu0 0
    %874 = vmatprep.subr.bf16.mxu0 0
    %875 = vmatpush1.bf16.msra.mxu0 0
    %876 = vmatprep.subr.bf16.mxu0 0
    %877 = vmatpush1.bf16.msra.mxu0 0
    %878 = vmatprep.subr.bf16.mxu0 0
    %879 = vmatpush1.bf16.msra.mxu0 0
    %880 = vmatprep.subr.bf16.mxu0 0
    %881 = vmatpush1.bf16.msra.mxu0 0
    %882 = vmatprep.subr.bf16.mxu0 0
    %883 = vmatpush1.bf16.msra.mxu0 0
    %884 = vmatprep.mubr.bf16.mxu0 0
    %885 = vmatmul.mubr.bf16.gmra.mrb[0].mxu0 %v850
    %v886 = vpop.f32.mrb[0].mxu0
    %v887 = vadd.f32 %v792, %v886
    %v888 = vpop.f32.mrb[0].mxu0
    %v889 = vadd.f32 %v796, %v888
    %v890 = vpop.f32.mrb[0].mxu0
    %v891 = vpop.f32.mrb[0].mxu0
    %892 = vdwg.mxu0
    %893 = vmatprep.subr.bf16.mxu0 %v836
    %894 = vmatpush1.bf16.msra.mxu0 %v835
    %895 = vmatprep.subr.bf16.mxu0 %v840
    %896 = vmatpush1.bf16.msra.mxu0 %v839
    %897 = vmatprep.subr.bf16.mxu0 0
    %898 = vmatpush1.bf16.msra.mxu0 0
    %899 = vmatprep.subr.bf16.mxu0 0
    %900 = vmatpush1.bf16.msra.mxu0 0
    %901 = vmatprep.subr.bf16.mxu0 0
    %902 = vmatpush1.bf16.msra.mxu0 0
    %903 = vmatprep.subr.bf16.mxu0 0
    %904 = vmatpush1.bf16.msra.mxu0 0
    %905 = vmatprep.subr.bf16.mxu0 0
    %906 = vmatpush1.bf16.msra.mxu0 0
    %907 = vmatprep.subr.bf16.mxu0 0
    %908 = vmatpush1.bf16.msra.mxu0 0
    %909 = vmatprep.subr.bf16.mxu0 0
    %910 = vmatpush1.bf16.msra.mxu0 0
    %911 = vmatprep.subr.bf16.mxu0 0
    %912 = vmatpush1.bf16.msra.mxu0 0
    %913 = vmatprep.subr.bf16.mxu0 0
    %914 = vmatpush1.bf16.msra.mxu0 0
    %915 = vmatprep.subr.bf16.mxu0 0
    %916 = vmatpush1.bf16.msra.mxu0 0
    %917 = vmatprep.subr.bf16.mxu0 0
    %918 = vmatpush1.bf16.msra.mxu0 0
    %919 = vmatprep.subr.bf16.mxu0 0
    %920 = vmatpush1.bf16.msra.mxu0 0
    %921 = vmatprep.subr.bf16.mxu0 0
    %922 = vmatpush1.bf16.msra.mxu0 0
    %923 = vmatprep.subr.bf16.mxu0 0
    %924 = vmatpush1.bf16.msra.mxu0 0
    %925 = vmatprep.mubr.bf16.mxu0 0
    %926 = vmatmul.mubr.bf16.gmra.mrb[0].mxu0 %v850
    %v927 = vpop.f32.mrb[0].mxu0
    %v928 = vadd.f32 %v800, %v927
    %v929 = vpop.f32.mrb[0].mxu0
    %v930 = vadd.f32 %v804, %v929
    %v931 = vpop.f32.mrb[0].mxu0
    %v932 = vpop.f32.mrb[0].mxu0
    %933 = vdwg.mxu0
    %v934 = vmax.f32 %v887, 0.0
    %v935 = vmax.f32 %v889, 0.0
    %v936 = vmax.f32 %v928, 0.0
    %v937 = vmax.f32 %v930, 0.0
    %v938 = vpack.c.bf16 %v934, %v934
    %v939 = vpack.c.bf16 %v935, %v935
    %v940 = vpack.c.bf16 %v936, %v936
    %v941 = vpack.c.bf16 %v937, %v937
    %v942 = vld [vmem:[#allocation11] sm:$0xff]
    %v943 = vld [vmem:[#allocation11 + $0x8] sm:$0xff]
    %v944 = vld [vmem:[#allocation11 + $0x10] sm:$0xff]
    %v945 = vld [vmem:[#allocation11 + $0x18] sm:$0xff]
    %v946 = vld [vmem:[#allocation11 + $0x20] sm:$0xff]
    %v947 = vld [vmem:[#allocation11 + $0x28] sm:$0xff]
    %v948 = vld [vmem:[#allocation11 + $0x30] sm:$0xff]
    %v949 = vld [vmem:[#allocation11 + $0x38] sm:$0xff]
    %v950 = vld [vmem:[#allocation11 + $0x40] sm:$0xff]
    %v951 = vld [vmem:[#allocation11 + $0x48] sm:$0xff]
    %v952 = vld [vmem:[#allocation11 + $0x50] sm:$0xff]
    %v953 = vld [vmem:[#allocation11 + $0x58] sm:$0xff]
    %v954 = vld [vmem:[#allocation11 + $0x60] sm:$0xff]
    %v955 = vld [vmem:[#allocation11 + $0x68] sm:$0xff]
    %v956 = vld [vmem:[#allocation11 + $0x70] sm:$0xff]
    %v957 = vld [vmem:[#allocation11 + $0x78] sm:$0xff]
    %v958 = vld [vmem:[#allocation11 + $0x80] sm:$0xff]
    %v959 = vld [vmem:[#allocation11 + $0x88] sm:$0xff]
    %v960 = vld [vmem:[#allocation11 + $0x90] sm:$0xff]
    %v961 = vld [vmem:[#allocation11 + $0x98] sm:$0xff]
    %v962 = vld [vmem:[#allocation11 + $0xa0] sm:$0xff]
    %v963 = vld [vmem:[#allocation11 + $0xa8] sm:$0xff]
    %v964 = vld [vmem:[#allocation11 + $0xb0] sm:$0xff]
    %v965 = vld [vmem:[#allocation11 + $0xb8] sm:$0xff]
    %v966 = vld [vmem:[#allocation11 + $0xc0] sm:$0xff]
    %v967 = vld [vmem:[#allocation11 + $0xc8] sm:$0xff]
    %v968 = vld [vmem:[#allocation11 + $0xd0] sm:$0xff]
    %v969 = vld [vmem:[#allocation11 + $0xd8] sm:$0xff]
    %v970 = vld [vmem:[#allocation11 + $0xe0] sm:$0xff]
    %v971 = vld [vmem:[#allocation11 + $0xe8] sm:$0xff]
    %v972 = vld [vmem:[#allocation11 + $0xf0] sm:$0xff]
    %v973 = vld [vmem:[#allocation11 + $0xf8] sm:$0xff]
    %v974 = vld [vmem:[#allocation11 + $0x100] sm:$0xff]
    %v975 = vld [vmem:[#allocation11 + $0x108] sm:$0xff]
    %v976 = vld [vmem:[#allocation11 + $0x110] sm:$0xff]
    %v977 = vld [vmem:[#allocation11 + $0x118] sm:$0xff]
    %v978 = vld [vmem:[#allocation11 + $0x120] sm:$0xff]
    %v979 = vld [vmem:[#allocation11 + $0x128] sm:$0xff]
    %v980 = vld [vmem:[#allocation11 + $0x130] sm:$0xff]
    %v981 = vld [vmem:[#allocation11 + $0x138] sm:$0xff]
    %v982 = vld [vmem:[#allocation11 + $0x140] sm:$0xff]
    %v983 = vld [vmem:[#allocation11 + $0x148] sm:$0xff]
    %v984 = vld [vmem:[#allocation11 + $0x150] sm:$0xff]
    %v985 = vld [vmem:[#allocation11 + $0x158] sm:$0xff]
    %v986 = vld [vmem:[#allocation11 + $0x160] sm:$0xff]
    %v987 = vld [vmem:[#allocation11 + $0x168] sm:$0xff]
    %v988 = vld [vmem:[#allocation11 + $0x170] sm:$0xff]
    %v989 = vld [vmem:[#allocation11 + $0x178] sm:$0xff]
    %v990 = vld [vmem:[#allocation11 + $0x180] sm:$0xff]
    %v991 = vld [vmem:[#allocation11 + $0x188] sm:$0xff]
    %v992 = vld [vmem:[#allocation11 + $0x190] sm:$0xff]
    %v993 = vld [vmem:[#allocation11 + $0x198] sm:$0xff]
    %v994 = vld [vmem:[#allocation11 + $0x1a0] sm:$0xff]
    %v995 = vld [vmem:[#allocation11 + $0x1a8] sm:$0xff]
    %v996 = vld [vmem:[#allocation11 + $0x1b0] sm:$0xff]
    %v997 = vld [vmem:[#allocation11 + $0x1b8] sm:$0xff]
    %v998 = vld [vmem:[#allocation11 + $0x1c0] sm:$0xff]
    %v999 = vld [vmem:[#allocation11 + $0x1c8] sm:$0xff]
    %v1000 = vld [vmem:[#allocation11 + $0x1d0] sm:$0xff]
    %v1001 = vld [vmem:[#allocation11 + $0x1d8] sm:$0xff]
    %v1002 = vld [vmem:[#allocation11 + $0x1e0] sm:$0xff]
    %v1003 = vld [vmem:[#allocation11 + $0x1e8] sm:$0xff]
    %v1004 = vld [vmem:[#allocation11 + $0x1f0] sm:$0xff]
    %v1005 = vld [vmem:[#allocation11 + $0x1f8] sm:$0xff]
    %v1006 = vld [vmem:[%s9] sm:$0x3]
    %v1008 = vlaneseq
    %v1009 = vshrl.u32 %v1008, 7
    %v1010 = vsub.s32 0, %v1009
    %v1011 = vrot.slane %v1006, %v1010
    %v1012 = vlaneseq
    %v1013 = vshrl.u32 %v1012, 7
    %v1014 = vsub.s32 1, %v1013
    %v1015 = vrot.slane %v1006, %v1014
    %v1082 = vunpack.c.l.b16 %v942
    %v1083 = vunpack.c.h.b16 %v942
    %v1084 = vunpack.c.l.b16 %v943
    %v1085 = vunpack.c.h.b16 %v943
    %v1086 = vunpack.c.l.b16 %v944
    %v1087 = vunpack.c.h.b16 %v944
    %v1088 = vunpack.c.l.b16 %v945
    %v1089 = vunpack.c.h.b16 %v945
    %v1090 = vunpack.c.l.b16 %v946
    %v1091 = vunpack.c.h.b16 %v946
    %v1092 = vunpack.c.l.b16 %v947
    %v1093 = vunpack.c.h.b16 %v947
    %v1094 = vunpack.c.l.b16 %v948
    %v1095 = vunpack.c.h.b16 %v948
    %v1096 = vunpack.c.l.b16 %v949
    %v1097 = vunpack.c.h.b16 %v949
    %v1098 = vunpack.c.l.b16 %v950
    %v1099 = vunpack.c.h.b16 %v950
    %v1100 = vunpack.c.l.b16 %v951
    %v1101 = vunpack.c.h.b16 %v951
    %v1102 = vunpack.c.l.b16 %v952
    %v1103 = vunpack.c.h.b16 %v952
    %v1104 = vunpack.c.l.b16 %v953
    %v1105 = vunpack.c.h.b16 %v953
    %v1106 = vunpack.c.l.b16 %v954
    %v1107 = vunpack.c.h.b16 %v954
    %v1108 = vunpack.c.l.b16 %v955
    %v1109 = vunpack.c.h.b16 %v955
    %v1110 = vunpack.c.l.b16 %v956
    %v1111 = vunpack.c.h.b16 %v956
    %v1112 = vunpack.c.l.b16 %v957
    %v1113 = vunpack.c.h.b16 %v957
    %v1114 = vunpack.c.l.b16 %v958
    %v1115 = vunpack.c.h.b16 %v958
    %v1116 = vunpack.c.l.b16 %v959
    %v1117 = vunpack.c.h.b16 %v959
    %v1118 = vunpack.c.l.b16 %v960
    %v1119 = vunpack.c.h.b16 %v960
    %v1120 = vunpack.c.l.b16 %v961
    %v1121 = vunpack.c.h.b16 %v961
    %v1122 = vunpack.c.l.b16 %v962
    %v1123 = vunpack.c.h.b16 %v962
    %v1124 = vunpack.c.l.b16 %v963
    %v1125 = vunpack.c.h.b16 %v963
    %v1126 = vunpack.c.l.b16 %v964
    %v1127 = vunpack.c.h.b16 %v964
    %v1128 = vunpack.c.l.b16 %v965
    %v1129 = vunpack.c.h.b16 %v965
    %v1130 = vunpack.c.l.b16 %v966
    %v1131 = vunpack.c.h.b16 %v966
    %v1132 = vunpack.c.l.b16 %v967
    %v1133 = vunpack.c.h.b16 %v967
    %v1134 = vunpack.c.l.b16 %v968
    %v1135 = vunpack.c.h.b16 %v968
    %v1136 = vunpack.c.l.b16 %v969
    %v1137 = vunpack.c.h.b16 %v969
    %v1138 = vunpack.c.l.b16 %v970
    %v1139 = vunpack.c.h.b16 %v970
    %v1140 = vunpack.c.l.b16 %v971
    %v1141 = vunpack.c.h.b16 %v971
    %v1142 = vunpack.c.l.b16 %v972
    %v1143 = vunpack.c.h.b16 %v972
    %v1144 = vunpack.c.l.b16 %v973
    %v1145 = vunpack.c.h.b16 %v973
    %v1146 = vunpack.c.l.b16 %v974
    %v1147 = vunpack.c.h.b16 %v974
    %v1148 = vunpack.c.l.b16 %v975
    %v1149 = vunpack.c.h.b16 %v975
    %v1150 = vunpack.c.l.b16 %v976
    %v1151 = vunpack.c.h.b16 %v976
    %v1152 = vunpack.c.l.b16 %v977
    %v1153 = vunpack.c.h.b16 %v977
    %v1154 = vunpack.c.l.b16 %v978
    %v1155 = vunpack.c.h.b16 %v978
    %v1156 = vunpack.c.l.b16 %v979
    %v1157 = vunpack.c.h.b16 %v979
    %v1158 = vunpack.c.l.b16 %v980
    %v1159 = vunpack.c.h.b16 %v980
    %v1160 = vunpack.c.l.b16 %v981
    %v1161 = vunpack.c.h.b16 %v981
    %v1162 = vunpack.c.l.b16 %v982
    %v1163 = vunpack.c.h.b16 %v982
    %v1164 = vunpack.c.l.b16 %v983
    %v1165 = vunpack.c.h.b16 %v983
    %v1166 = vunpack.c.l.b16 %v984
    %v1167 = vunpack.c.h.b16 %v984
    %v1168 = vunpack.c.l.b16 %v985
    %v1169 = vunpack.c.h.b16 %v985
    %v1170 = vunpack.c.l.b16 %v986
    %v1171 = vunpack.c.h.b16 %v986
    %v1172 = vunpack.c.l.b16 %v987
    %v1173 = vunpack.c.h.b16 %v987
    %v1174 = vunpack.c.l.b16 %v988
    %v1175 = vunpack.c.h.b16 %v988
    %v1176 = vunpack.c.l.b16 %v989
    %v1177 = vunpack.c.h.b16 %v989
    %v1178 = vunpack.c.l.b16 %v990
    %v1179 = vunpack.c.h.b16 %v990
    %v1180 = vunpack.c.l.b16 %v991
    %v1181 = vunpack.c.h.b16 %v991
    %v1182 = vunpack.c.l.b16 %v992
    %v1183 = vunpack.c.h.b16 %v992
    %v1184 = vunpack.c.l.b16 %v993
    %v1185 = vunpack.c.h.b16 %v993
    %v1186 = vunpack.c.l.b16 %v994
    %v1187 = vunpack.c.h.b16 %v994
    %v1188 = vunpack.c.l.b16 %v995
    %v1189 = vunpack.c.h.b16 %v995
    %v1190 = vunpack.c.l.b16 %v996
    %v1191 = vunpack.c.h.b16 %v996
    %v1192 = vunpack.c.l.b16 %v997
    %v1193 = vunpack.c.h.b16 %v997
    %v1194 = vunpack.c.l.b16 %v998
    %v1195 = vunpack.c.h.b16 %v998
    %v1196 = vunpack.c.l.b16 %v999
    %v1197 = vunpack.c.h.b16 %v999
    %v1198 = vunpack.c.l.b16 %v1000
    %v1199 = vunpack.c.h.b16 %v1000
    %v1200 = vunpack.c.l.b16 %v1001
    %v1201 = vunpack.c.h.b16 %v1001
    %v1202 = vunpack.c.l.b16 %v1002
    %v1203 = vunpack.c.h.b16 %v1002
    %v1204 = vunpack.c.l.b16 %v1003
    %v1205 = vunpack.c.h.b16 %v1003
    %v1206 = vunpack.c.l.b16 %v1004
    %v1207 = vunpack.c.h.b16 %v1004
    %v1208 = vunpack.c.l.b16 %v1005
    %v1209 = vunpack.c.h.b16 %v1005
    %v1210 = vpack.c.b16 %v1084, %v1082
    %v1211 = vpack.c.b16 %v1085, %v1083
    %v1212 = vpack.c.b16 %v1088, %v1086
    %v1213 = vpack.c.b16 %v1089, %v1087
    %v1214 = vpack.c.b16 %v1092, %v1090
    %v1215 = vpack.c.b16 %v1093, %v1091
    %v1216 = vpack.c.b16 %v1096, %v1094
    %v1217 = vpack.c.b16 %v1097, %v1095
    %v1218 = vpack.c.b16 %v1100, %v1098
    %v1219 = vpack.c.b16 %v1101, %v1099
    %v1220 = vpack.c.b16 %v1104, %v1102
    %v1221 = vpack.c.b16 %v1105, %v1103
    %v1222 = vpack.c.b16 %v1108, %v1106
    %v1223 = vpack.c.b16 %v1109, %v1107
    %v1224 = vpack.c.b16 %v1112, %v1110
    %v1225 = vpack.c.b16 %v1113, %v1111
    %v1226 = vpack.c.b16 %v1116, %v1114
    %v1227 = vpack.c.b16 %v1117, %v1115
    %v1228 = vpack.c.b16 %v1120, %v1118
    %v1229 = vpack.c.b16 %v1121, %v1119
    %v1230 = vpack.c.b16 %v1124, %v1122
    %v1231 = vpack.c.b16 %v1125, %v1123
    %v1232 = vpack.c.b16 %v1128, %v1126
    %v1233 = vpack.c.b16 %v1129, %v1127
    %v1234 = vpack.c.b16 %v1132, %v1130
    %v1235 = vpack.c.b16 %v1133, %v1131
    %v1236 = vpack.c.b16 %v1136, %v1134
    %v1237 = vpack.c.b16 %v1137, %v1135
    %v1238 = vpack.c.b16 %v1140, %v1138
    %v1239 = vpack.c.b16 %v1141, %v1139
    %v1240 = vpack.c.b16 %v1144, %v1142
    %v1241 = vpack.c.b16 %v1145, %v1143
    %v1242 = vpack.c.b16 %v1148, %v1146
    %v1243 = vpack.c.b16 %v1149, %v1147
    %v1244 = vpack.c.b16 %v1152, %v1150
    %v1245 = vpack.c.b16 %v1153, %v1151
    %v1246 = vpack.c.b16 %v1156, %v1154
    %v1247 = vpack.c.b16 %v1157, %v1155
    %v1248 = vpack.c.b16 %v1160, %v1158
    %v1249 = vpack.c.b16 %v1161, %v1159
    %v1250 = vpack.c.b16 %v1164, %v1162
    %v1251 = vpack.c.b16 %v1165, %v1163
    %v1252 = vpack.c.b16 %v1168, %v1166
    %v1253 = vpack.c.b16 %v1169, %v1167
    %v1254 = vpack.c.b16 %v1172, %v1170
    %v1255 = vpack.c.b16 %v1173, %v1171
    %v1256 = vpack.c.b16 %v1176, %v1174
    %v1257 = vpack.c.b16 %v1177, %v1175
    %v1258 = vpack.c.b16 %v1180, %v1178
    %v1259 = vpack.c.b16 %v1181, %v1179
    %v1260 = vpack.c.b16 %v1184, %v1182
    %v1261 = vpack.c.b16 %v1185, %v1183
    %v1262 = vpack.c.b16 %v1188, %v1186
    %v1263 = vpack.c.b16 %v1189, %v1187
    %v1264 = vpack.c.b16 %v1192, %v1190
    %v1265 = vpack.c.b16 %v1193, %v1191
    %v1266 = vpack.c.b16 %v1196, %v1194
    %v1267 = vpack.c.b16 %v1197, %v1195
    %v1268 = vpack.c.b16 %v1200, %v1198
    %v1269 = vpack.c.b16 %v1201, %v1199
    %v1270 = vpack.c.b16 %v1204, %v1202
    %v1271 = vpack.c.b16 %v1205, %v1203
    %v1272 = vpack.c.b16 %v1208, %v1206
    %v1273 = vpack.c.b16 %v1209, %v1207
    %1338 = vmatprep.subr.bf16.mxu0 %v1211
    %1339 = vmatpush1.bf16.msra.mxu0 %v1210
    %1340 = vmatprep.subr.bf16.mxu0 %v1213
    %1341 = vmatpush1.bf16.msra.mxu0 %v1212
    %1342 = vmatprep.subr.bf16.mxu0 %v1215
    %1343 = vmatpush1.bf16.msra.mxu0 %v1214
    %1344 = vmatprep.subr.bf16.mxu0 %v1217
    %1345 = vmatpush1.bf16.msra.mxu0 %v1216
    %1346 = vmatprep.subr.bf16.mxu0 %v1219
    %1347 = vmatpush1.bf16.msra.mxu0 %v1218
    %1348 = vmatprep.subr.bf16.mxu0 %v1221
    %1349 = vmatpush1.bf16.msra.mxu0 %v1220
    %1350 = vmatprep.subr.bf16.mxu0 %v1223
    %1351 = vmatpush1.bf16.msra.mxu0 %v1222
    %1352 = vmatprep.subr.bf16.mxu0 %v1225
    %1353 = vmatpush1.bf16.msra.mxu0 %v1224
    %1354 = vmatprep.subr.bf16.mxu0 %v1227
    %1355 = vmatpush1.bf16.msra.mxu0 %v1226
    %1356 = vmatprep.subr.bf16.mxu0 %v1229
    %1357 = vmatpush1.bf16.msra.mxu0 %v1228
    %1358 = vmatprep.subr.bf16.mxu0 %v1231
    %1359 = vmatpush1.bf16.msra.mxu0 %v1230
    %1360 = vmatprep.subr.bf16.mxu0 %v1233
    %1361 = vmatpush1.bf16.msra.mxu0 %v1232
    %1362 = vmatprep.subr.bf16.mxu0 %v1235
    %1363 = vmatpush1.bf16.msra.mxu0 %v1234
    %1364 = vmatprep.subr.bf16.mxu0 %v1237
    %1365 = vmatpush1.bf16.msra.mxu0 %v1236
    %1366 = vmatprep.subr.bf16.mxu0 %v1239
    %1367 = vmatpush1.bf16.msra.mxu0 %v1238
    %1368 = vmatprep.subr.bf16.mxu0 %v1241
    %1369 = vmatpush1.bf16.msra.mxu0 %v1240
    %1370 = vmatprep.mubr.bf16.mxu0 %v939
    %1371 = vmatmul.mubr.bf16.gmra.mrb[0].mxu0 %v938
    %v1372 = vpop.f32.mrb[0].mxu0
    %v1373 = vadd.f32 %v1011, %v1372
    %v1374 = vpop.f32.mrb[0].mxu0
    %v1375 = vadd.f32 %v1015, %v1374
    %v1376 = vpop.f32.mrb[0].mxu0
    %v1377 = vpop.f32.mrb[0].mxu0
    %1378 = vdwg.mxu0
    %1379 = vmatprep.subr.bf16.mxu0 %v1243
    %1380 = vmatpush1.bf16.msra.mxu0 %v1242
    %1381 = vmatprep.subr.bf16.mxu0 %v1245
    %1382 = vmatpush1.bf16.msra.mxu0 %v1244
    %1383 = vmatprep.subr.bf16.mxu0 %v1247
    %1384 = vmatpush1.bf16.msra.mxu0 %v1246
    %1385 = vmatprep.subr.bf16.mxu0 %v1249
    %1386 = vmatpush1.bf16.msra.mxu0 %v1248
    %1387 = vmatprep.subr.bf16.mxu0 %v1251
    %1388 = vmatpush1.bf16.msra.mxu0 %v1250
    %1389 = vmatprep.subr.bf16.mxu0 %v1253
    %1390 = vmatpush1.bf16.msra.mxu0 %v1252
    %1391 = vmatprep.subr.bf16.mxu0 %v1255
    %1392 = vmatpush1.bf16.msra.mxu0 %v1254
    %1393 = vmatprep.subr.bf16.mxu0 %v1257
    %1394 = vmatpush1.bf16.msra.mxu0 %v1256
    %1395 = vmatprep.subr.bf16.mxu0 %v1259
    %1396 = vmatpush1.bf16.msra.mxu0 %v1258
    %1397 = vmatprep.subr.bf16.mxu0 %v1261
    %1398 = vmatpush1.bf16.msra.mxu0 %v1260
    %1399 = vmatprep.subr.bf16.mxu0 %v1263
    %1400 = vmatpush1.bf16.msra.mxu0 %v1262
    %1401 = vmatprep.subr.bf16.mxu0 %v1265
    %1402 = vmatpush1.bf16.msra.mxu0 %v1264
    %1403 = vmatprep.subr.bf16.mxu0 %v1267
    %1404 = vmatpush1.bf16.msra.mxu0 %v1266
    %1405 = vmatprep.subr.bf16.mxu0 %v1269
    %1406 = vmatpush1.bf16.msra.mxu0 %v1268
    %1407 = vmatprep.subr.bf16.mxu0 %v1271
    %1408 = vmatpush1.bf16.msra.mxu0 %v1270
    %1409 = vmatprep.subr.bf16.mxu0 %v1273
    %1410 = vmatpush1.bf16.msra.mxu0 %v1272
    %1411 = vmatprep.mubr.bf16.mxu0 %v941
    %1412 = vmatmul.mubr.bf16.gmra.mrb[0].mxu0 %v940
    %v1413 = vpop.f32.mrb[0].mxu0
    %v1414 = vadd.f32 %v1373, %v1413
    %v1415 = vpop.f32.mrb[0].mxu0
    %v1416 = vadd.f32 %v1375, %v1415
    %v1417 = vpop.f32.mrb[0].mxu0
    %v1418 = vpop.f32.mrb[0].mxu0
    %1419 = vdwg.mxu0
    %v1420 = vmul.f32 %v1414, %v1414
    %v1421 = vmul.f32 %v1416, %v1416
    %v1422 = vadd.f32 %v1420, %v1421
    %1423 = vadd.xlane.f32.xlu0 %v1422
    %v1424 = vpop.xlane.xlu0 %1423
    %v1425 = vrsqrt.pop %v1424
    %v1426 = vmul.f32 %v1424, %v1425
    %vm1427 = vcmp.eq.f32.partialorder %v1424, inf
    %v1428 = vsel %vm1427, %v1424, %v1426
    %vm1429 = vcmp.eq.f32.partialorder %v1424, 0.0
    %v1430 = vand.u32 %v1424, 2147483648
    %v1431 = vsel %vm1429, %v1430, %v1428
    %v1432 = vmax.f32 %v1431, 1e-12
    %v1433 = vrcp.pop %v1432
    %v1434 = vmul.f32 %v1414, %v1433
    %v1435 = vmul.f32 %v1416, %v1433
    %v1436 = vmul.f32 %v776, %v1434
    %v1437 = vmul.f32 %v777, %v1435
    %v1438 = vadd.f32 %v1436, %v1437
    %1439 = vadd.xlane.f32.xlu0 %v1438
    %v1440 = vpop.xlane.xlu0 %1439
    %1441 = vst [vmem:[#allocation14] sm:$0xff] %v1440
    %v1442 = vpack.c.bf16 %v776, %v776
    %v1443 = vpack.c.bf16 %v777, %v777
    %v1446 = vunpack.c.l.b16 %v1442
    %v1447 = vunpack.c.l.b16 %v1443
    %v1448 = vpack.c.b16 %v1447, %v1446
    %1450 = vst [vmem:[#allocation13] sm:$0xff] %v1448
    %1451 = vxpose.xlu0.b32.start [1/16] %v1434, 128
    %1452 = vxpose.xlu0.b32.cont [2/16] 0.0, 128
    %1453 = vxpose.xlu0.b32.cont [3/16] 0.0, 128
    %1454 = vxpose.xlu0.b32.cont [4/16] 0.0, 128
    %1455 = vxpose.xlu0.b32.cont [5/16] 0.0, 128
    %1456 = vxpose.xlu0.b32.cont [6/16] 0.0, 128
    %1457 = vxpose.xlu0.b32.cont [7/16] 0.0, 128
    %1458 = vxpose.xlu0.b32.cont [8/16] 0.0, 128
    %1459 = vxpose.xlu0.b32.cont [9/16] 0.0, 128
    %1460 = vxpose.xlu0.b32.cont [10/16] 0.0, 128
    %1461 = vxpose.xlu0.b32.cont [11/16] 0.0, 128
    %1462 = vxpose.xlu0.b32.cont [12/16] 0.0, 128
    %1463 = vxpose.xlu0.b32.cont [13/16] 0.0, 128
    %1464 = vxpose.xlu0.b32.cont [14/16] 0.0, 128
    %1465 = vxpose.xlu0.b32.cont [15/16] 0.0, 128
    %1466 = vxpose.xlu0.b32.end [16/16] 0.0, 128
    %v1467 = vpop.trf.xlu0
    %v1468 = vpop.trf.xlu0
    %v1469 = vpop.trf.xlu0
    %v1470 = vpop.trf.xlu0
    %v1471 = vpop.trf.xlu0
    %v1472 = vpop.trf.xlu0
    %v1473 = vpop.trf.xlu0
    %v1474 = vpop.trf.xlu0
    %v1475 = vpop.trf.xlu0
    %v1476 = vpop.trf.xlu0
    %v1477 = vpop.trf.xlu0
    %v1478 = vpop.trf.xlu0
    %v1479 = vpop.trf.xlu0
    %v1480 = vpop.trf.xlu0
    %v1481 = vpop.trf.xlu0
    %v1482 = vpop.trf.xlu0
    %1483 = vxpose.xlu0.b32.start [1/16] %v1435, 128
    %1484 = vxpose.xlu0.b32.cont [2/16] 0.0, 128
    %1485 = vxpose.xlu0.b32.cont [3/16] 0.0, 128
    %1486 = vxpose.xlu0.b32.cont [4/16] 0.0, 128
    %1487 = vxpose.xlu0.b32.cont [5/16] 0.0, 128
    %1488 = vxpose.xlu0.b32.cont [6/16] 0.0, 128
    %1489 = vxpose.xlu0.b32.cont [7/16] 0.0, 128
    %1490 = vxpose.xlu0.b32.cont [8/16] 0.0, 128
    %1491 = vxpose.xlu0.b32.cont [9/16] 0.0, 128
    %1492 = vxpose.xlu0.b32.cont [10/16] 0.0, 128
    %1493 = vxpose.xlu0.b32.cont [11/16] 0.0, 128
    %1494 = vxpose.xlu0.b32.cont [12/16] 0.0, 128
    %1495 = vxpose.xlu0.b32.cont [13/16] 0.0, 128
    %1496 = vxpose.xlu0.b32.cont [14/16] 0.0, 128
    %1497 = vxpose.xlu0.b32.cont [15/16] 0.0, 128
    %1498 = vxpose.xlu0.b32.end [16/16] 0.0, 128
    %v1499 = vpop.trf.xlu0
    %v1500 = vpop.trf.xlu0
    %v1501 = vpop.trf.xlu0
    %v1502 = vpop.trf.xlu0
    %v1503 = vpop.trf.xlu0
    %v1504 = vpop.trf.xlu0
    %v1505 = vpop.trf.xlu0
    %v1506 = vpop.trf.xlu0
    %v1507 = vpop.trf.xlu0
    %v1508 = vpop.trf.xlu0
    %v1509 = vpop.trf.xlu0
    %v1510 = vpop.trf.xlu0
    %v1511 = vpop.trf.xlu0
    %v1512 = vpop.trf.xlu0
    %v1513 = vpop.trf.xlu0
    %v1514 = vpop.trf.xlu0
    %v1515 = vpack.c.bf16 %v1468, %v1467
    %v1516 = vpack.c.bf16 %v1470, %v1469
    %v1517 = vpack.c.bf16 %v1472, %v1471
    %v1518 = vpack.c.bf16 %v1474, %v1473
    %v1519 = vpack.c.bf16 %v1476, %v1475
    %v1520 = vpack.c.bf16 %v1478, %v1477
    %v1521 = vpack.c.bf16 %v1480, %v1479
    %v1522 = vpack.c.bf16 %v1482, %v1481
    %v1523 = vpack.c.bf16 %v1500, %v1499
    %v1524 = vpack.c.bf16 %v1502, %v1501
    %v1525 = vpack.c.bf16 %v1504, %v1503
    %v1526 = vpack.c.bf16 %v1506, %v1505
    %v1527 = vpack.c.bf16 %v1508, %v1507
    %v1528 = vpack.c.bf16 %v1510, %v1509
    %v1529 = vpack.c.bf16 %v1512, %v1511
    %v1530 = vpack.c.bf16 %v1514, %v1513
    %v1547 = vunpack.c.l.b16 %v1515
    %v1548 = vunpack.c.h.b16 %v1515
    %v1549 = vunpack.c.l.b16 %v1516
    %v1550 = vunpack.c.h.b16 %v1516
    %v1551 = vunpack.c.l.b16 %v1517
    %v1552 = vunpack.c.h.b16 %v1517
    %v1553 = vunpack.c.l.b16 %v1518
    %v1554 = vunpack.c.h.b16 %v1518
    %v1555 = vunpack.c.l.b16 %v1519
    %v1556 = vunpack.c.h.b16 %v1519
    %v1557 = vunpack.c.l.b16 %v1520
    %v1558 = vunpack.c.h.b16 %v1520
    %v1559 = vunpack.c.l.b16 %v1521
    %v1560 = vunpack.c.h.b16 %v1521
    %v1561 = vunpack.c.l.b16 %v1522
    %v1562 = vunpack.c.h.b16 %v1522
    %v1563 = vunpack.c.l.b16 %v1523
    %v1564 = vunpack.c.h.b16 %v1523
    %v1565 = vunpack.c.l.b16 %v1524
    %v1566 = vunpack.c.h.b16 %v1524
    %v1567 = vunpack.c.l.b16 %v1525
    %v1568 = vunpack.c.h.b16 %v1525
    %v1569 = vunpack.c.l.b16 %v1526
    %v1570 = vunpack.c.h.b16 %v1526
    %v1571 = vunpack.c.l.b16 %v1527
    %v1572 = vunpack.c.h.b16 %v1527
    %v1573 = vunpack.c.l.b16 %v1528
    %v1574 = vunpack.c.h.b16 %v1528
    %v1575 = vunpack.c.l.b16 %v1529
    %v1576 = vunpack.c.h.b16 %v1529
    %v1577 = vunpack.c.l.b16 %v1530
    %v1578 = vunpack.c.h.b16 %v1530
    %v1579 = vpack.c.b16 %v1547, %v1547
    %v1580 = vpack.c.b16 %v1548, %v1548
    %v1581 = vpack.c.b16 %v1549, %v1549
    %v1582 = vpack.c.b16 %v1550, %v1550
    %v1583 = vpack.c.b16 %v1551, %v1551
    %v1584 = vpack.c.b16 %v1552, %v1552
    %v1585 = vpack.c.b16 %v1553, %v1553
    %v1586 = vpack.c.b16 %v1554, %v1554
    %v1587 = vpack.c.b16 %v1555, %v1555
    %v1588 = vpack.c.b16 %v1556, %v1556
    %v1589 = vpack.c.b16 %v1557, %v1557
    %v1590 = vpack.c.b16 %v1558, %v1558
    %v1591 = vpack.c.b16 %v1559, %v1559
    %v1592 = vpack.c.b16 %v1560, %v1560
    %v1593 = vpack.c.b16 %v1561, %v1561
    %v1594 = vpack.c.b16 %v1562, %v1562
    %v1595 = vpack.c.b16 %v1563, %v1563
    %v1596 = vpack.c.b16 %v1564, %v1564
    %v1597 = vpack.c.b16 %v1565, %v1565
    %v1598 = vpack.c.b16 %v1566, %v1566
    %v1599 = vpack.c.b16 %v1567, %v1567
    %v1600 = vpack.c.b16 %v1568, %v1568
    %v1601 = vpack.c.b16 %v1569, %v1569
    %v1602 = vpack.c.b16 %v1570, %v1570
    %v1603 = vpack.c.b16 %v1571, %v1571
    %v1604 = vpack.c.b16 %v1572, %v1572
    %v1605 = vpack.c.b16 %v1573, %v1573
    %v1606 = vpack.c.b16 %v1574, %v1574
    %v1607 = vpack.c.b16 %v1575, %v1575
    %v1608 = vpack.c.b16 %v1576, %v1576
    %v1609 = vpack.c.b16 %v1577, %v1577
    %v1610 = vpack.c.b16 %v1578, %v1578
    %vm1643 = vcmask 60416
    %1644 = vst.msk [vmem:[%s11] sm:$0xf] %vm1643, %v1579
    %1645 = vst.msk [vmem:[%s11 + $0x4] sm:$0xf] %vm1643, %v1580
    %1646 = vst.msk [vmem:[%s11 + $0x8] sm:$0xf] %vm1643, %v1581
    %1647 = vst.msk [vmem:[%s11 + $0xc] sm:$0xf] %vm1643, %v1582
    %1648 = vst.msk [vmem:[%s11 + $0x10] sm:$0xf] %vm1643, %v1583
    %1649 = vst.msk [vmem:[%s11 + $0x14] sm:$0xf] %vm1643, %v1584
    %1650 = vst.msk [vmem:[%s11 + $0x18] sm:$0xf] %vm1643, %v1585
    %1651 = vst.msk [vmem:[%s11 + $0x1c] sm:$0xf] %vm1643, %v1586
    %1652 = vst.msk [vmem:[%s11 + $0x20] sm:$0xf] %vm1643, %v1587
    %1653 = vst.msk [vmem:[%s11 + $0x24] sm:$0xf] %vm1643, %v1588
    %1654 = vst.msk [vmem:[%s11 + $0x28] sm:$0xf] %vm1643, %v1589
    %1655 = vst.msk [vmem:[%s11 + $0x2c] sm:$0xf] %vm1643, %v1590
    %1656 = vst.msk [vmem:[%s11 + $0x30] sm:$0xf] %vm1643, %v1591
    %1657 = vst.msk [vmem:[%s11 + $0x34] sm:$0xf] %vm1643, %v1592
    %1658 = vst.msk [vmem:[%s11 + $0x38] sm:$0xf] %vm1643, %v1593
    %1659 = vst.msk [vmem:[%s11 + $0x3c] sm:$0xf] %vm1643, %v1594
    %1660 = vst.msk [vmem:[%s11 + $0x40] sm:$0xf] %vm1643, %v1595
    %1661 = vst.msk [vmem:[%s11 + $0x44] sm:$0xf] %vm1643, %v1596
    %1662 = vst.msk [vmem:[%s11 + $0x48] sm:$0xf] %vm1643, %v1597
    %1663 = vst.msk [vmem:[%s11 + $0x4c] sm:$0xf] %vm1643, %v1598
    %1664 = vst.msk [vmem:[%s11 + $0x50] sm:$0xf] %vm1643, %v1599
    %1665 = vst.msk [vmem:[%s11 + $0x54] sm:$0xf] %vm1643, %v1600
    %1666 = vst.msk [vmem:[%s11 + $0x58] sm:$0xf] %vm1643, %v1601
    %1667 = vst.msk [vmem:[%s11 + $0x5c] sm:$0xf] %vm1643, %v1602
    %1668 = vst.msk [vmem:[%s11 + $0x60] sm:$0xf] %vm1643, %v1603
    %1669 = vst.msk [vmem:[%s11 + $0x64] sm:$0xf] %vm1643, %v1604
    %1670 = vst.msk [vmem:[%s11 + $0x68] sm:$0xf] %vm1643, %v1605
    %1671 = vst.msk [vmem:[%s11 + $0x6c] sm:$0xf] %vm1643, %v1606
    %1672 = vst.msk [vmem:[%s11 + $0x70] sm:$0xf] %vm1643, %v1607
    %1673 = vst.msk [vmem:[%s11 + $0x74] sm:$0xf] %vm1643, %v1608
    %1674 = vst.msk [vmem:[%s11 + $0x78] sm:$0xf] %vm1643, %v1609
    %1675 = vst.msk [vmem:[%s11 + $0x7c] sm:$0xf] %vm1643, %v1610
    // Predicated region
    $region66: #{tpu_custom_call.1} parent=1 // pred_check
      _
    $region67: #{tpu_custom_call.1} parent=1 // pred_check_branch
      %1677 = sbr.rel (0) target = $region69
    $region68: #{tpu_custom_call.1} parent=1 // pred_region
      %s1679 = ssub.s32 128, 128
      %1680 = vsyncadd [#allocation4], %s1679
      %s1682 = sshll.u32 [#allocation13], 4
      %s1683 = int_to_ptr.vmem [resolvable:$true] %s1682
      %1685 = dma.vmem_to_hbm [thread:$0]  %s1683, 128, %s10, [#allocation4]
    $region69: #{tpu_custom_call.1} parent=1 // pred_fallthru
      _
    // Predicated region
    $region70: #{tpu_custom_call.1} parent=1 // pred_check
      _
    $region71: #{tpu_custom_call.1} parent=1 // pred_check_branch
      %1687 = sbr.rel (0) target = $region73
    $region72: #{tpu_custom_call.1} parent=1 // pred_region
      _
    $region73: #{tpu_custom_call.1} parent=1 // pred_fallthru
      _
    // Predicated region
    $region74: #{tpu_custom_call.1} parent=1 // pred_check
      _
    $region75: #{tpu_custom_call.1} parent=1 // pred_check_branch
      %1689 = sbr.rel (0) target = $region77
    $region76: #{tpu_custom_call.1} parent=1 // pred_region
      %s1691 = ssub.s32 128, 128
      %1692 = vsyncadd [#allocation15], %s1691
      %s1694 = sshll.u32 [#allocation14], 4
      %s1695 = int_to_ptr.vmem [resolvable:$true] %s1694
      %1697 = dma.vmem_to_hbm [thread:$0]  %s1695, 128, %s12, [#allocation15]
    $region77: #{tpu_custom_call.1} parent=1 // pred_fallthru
      _
    // Predicated region
    $region78: #{tpu_custom_call.1} parent=1 // pred_check
      _
    $region79: #{tpu_custom_call.1} parent=1 // pred_check_branch
      %1699 = sbr.rel (0) target = $region81
    $region80: #{tpu_custom_call.1} parent=1 // pred_region
      %1700 = dma.done [#allocation4], 128
    $region81: #{tpu_custom_call.1} parent=1 // pred_fallthru
      _
    // Predicated region
    $region82: #{tpu_custom_call.1} parent=1 // pred_check
      _
    $region83: #{tpu_custom_call.1} parent=1 // pred_check_branch
      %1702 = sbr.rel (0) target = $region85
    $region84: #{tpu_custom_call.1} parent=1 // pred_region
      _
    $region85: #{tpu_custom_call.1} parent=1 // pred_fallthru
      _
    // Predicated region
    $region86: #{tpu_custom_call.1} parent=1 // pred_check
      _
    $region87: #{tpu_custom_call.1} parent=1 // pred_check_branch
      %1704 = sbr.rel (0) target = $region89
    $region88: #{tpu_custom_call.1} parent=1 // pred_region
      %1705 = dma.done [#allocation15], 128
    $region89: #{tpu_custom_call.1} parent=1 // pred_fallthru
      _
    %1706 = vsyncpa [#allocation3], 1
    %1707 = vsyncpa [#allocation6], 1
    %1708 = vsyncpa [#allocation9], 1
    %1709 = vsyncpa [#allocation12], 1
    %1710 = vsyncpa [#allocation4], 1
    %1711 = vsyncpa [#allocation15], 1

</llo_original>
